<compile_context>
chip_gen: v7x
topology: tpu7x:2x2x1
jax: 0.10.0
libtpu: 0.0.40
codegen_flags: <defaults>
</compile_context>

<pallas_src>
import jax
import jax.numpy as jnp
from jax.experimental import pallas as pl
from jax.experimental.pallas import tpu as pltpu

LSTM_H = 40        # hidden size of the LSTM
LIN1_H = 20        # hidden size of Linear1
GP = 128           # per-gate lane padding (lane-tile aligned)


def _round_up(x, m):
    return ((x + m - 1) // m) * m


def _choose_b_tile(b):
    """Tunable batch tile: fill MXU rows when batch allows, keep >=2 grid
    steps for v7x's 2 TensorCores, floor at one sublane tile (8)."""
    b8 = max(_round_up(b, 8), 8)
    if b8 <= 8:
        return 8
    if b8 >= 512:
        return 256
    return min(256, _round_up((b8 + 1) // 2, 8))


def _lstm_regressor_kernel(x_ref, wih_ref, whh_ref, bias_ref,
                           w1_ref, b1_ref, w2_ref, b2_ref, out_ref, pre_ref):
    """One batch-tile of the full Regressor_v1 forward.

    x_ref    : (T, Bt, D)   time-major f32 input tile (MUST be time-major:
                            the pre_ref[t*Bt:(t+1)*Bt] slicing below relies
                            on it).
    wih_ref  : (D, 4*GP)    bf16 W_ih^T, gate cols padded, order (i,f,o,g)
    whh_ref  : (GP, 4*GP)   bf16 W_hh^T, rows + gate cols padded, (i,f,o,g)
    bias_ref : (1, 4*GP)    f32  b_ih + b_hh, gate cols padded, (i,f,o,g)
    w1_ref   : (GP, 128)    bf16 Linear1.weight^T, zero-padded
    b1_ref   : (1, 128)     f32  Linear1.bias, zero-padded
    w2_ref   : (1, 128)     f32  Linear2.weight (row), zero-padded
    b2_ref   : (1, 1)       f32  Linear2.bias
    out_ref  : (Bt, 128)    lane-dense output tile (z2 broadcast over lanes)
    pre_ref  : (T*Bt, 4*GP) f32 VMEM scratch for the hoisted input projection
    """
    T, Bt, D = x_ref.shape

    # ---- Hoisted input projection (one big bf16 matmul, off the serial
    #      chain), written straight to VMEM scratch so it never occupies
    #      vregs across the unrolled recurrence.
    x_flat = x_ref[...].astype(jnp.bfloat16).reshape(T * Bt, D)
    pre_ref[...] = (
        jnp.dot(x_flat, wih_ref[...], preferred_element_type=jnp.float32)
        + bias_ref[...])

    h = jnp.zeros((Bt, GP), jnp.float32)
    c = jnp.zeros((Bt, GP), jnp.float32)

    # ---- Fully unrolled recurrence (T is small & static).  Only the
    #      h @ W_hh^T matmul and the gate elementwise math sit on the serial
    #      dependency chain; per-step operands are re-loaded from VMEM.
    for t in range(T):
        gates = pre_ref[t * Bt:(t + 1) * Bt, :] + jnp.dot(
            h.astype(jnp.bfloat16), whh_ref[...],
            preferred_element_type=jnp.float32)               # (Bt, 4*GP)
        # Gate layout (i, f, o, g): one sigmoid over 3 lane tiles, one tanh.
        ifo = jax.nn.sigmoid(gates[:, :3 * GP])
        g_g = jnp.tanh(gates[:, 3 * GP:])
        i_g = ifo[:, 0 * GP:1 * GP]
        f_g = ifo[:, 1 * GP:2 * GP]
        o_g = ifo[:, 2 * GP:3 * GP]
        c = f_g * c + i_g * g_g
        h = o_g * jnp.tanh(c)

    # ---- Head: Linear1 -> Sigmoid -> Linear2.
    z1 = (jnp.dot(h.astype(jnp.bfloat16), w1_ref[...],
                  preferred_element_type=jnp.float32) + b1_ref[...])
    s1 = jax.nn.sigmoid(z1)                                   # padded lanes = 0.5
    # Linear2 as VPU multiply + lane reduce (padded w2 lanes are 0 -> no effect).
    z2 = jnp.sum(s1 * w2_ref[...], axis=-1, keepdims=True) + b2_ref[...]
    # Lane-dense store: broadcast the scalar-per-row result across 128 lanes.
    out_ref[...] = jnp.broadcast_to(z2, out_ref.shape).astype(out_ref.dtype)


@jax.jit
def regressor_v1_forward(x, padded):
    """x: (B, T, D) float32 batch-first (matches nn.LSTM(batch_first=True))."""
    B, T, D = x.shape
    b_tile = _choose_b_tile(B)
    b_pad = max(_round_up(B, b_tile), b_tile)

    # Time-major + batch pad (tiny at these shapes; see TODO above for large inputs).
    x_tb = jnp.transpose(x, (1, 0, 2))
    x_tb = jnp.pad(x_tb, ((0, 0), (0, b_pad - B), (0, 0)))

    grid = (b_pad // b_tile,)

    def full(shape):
        # Weight tensors: fully resident, same block index for every grid step
        # (Pallas does not re-DMA when the block index is unchanged).
        return pl.BlockSpec(shape, lambda b: (0,) * len(shape))

    out = pl.pallas_call(
        _lstm_regressor_kernel,
        out_shape=jax.ShapeDtypeStruct((b_pad, 128), jnp.float32),
        grid=grid,
        in_specs=[
            pl.BlockSpec((T, b_tile, D), lambda b: (0, b, 0)),
            full(padded["wih"].shape),
            full(padded["whh"].shape),
            full(padded["bias"].shape),
            full(padded["w1"].shape),
            full(padded["b1"].shape),
            full(padded["w2"].shape),
            full(padded["b2"].shape),
        ],
        out_specs=pl.BlockSpec((b_tile, 128), lambda b: (b, 0)),
        scratch_shapes=[pltpu.VMEM((T * b_tile, 4 * GP), jnp.float32)],
        compiler_params=pltpu.CompilerParams(
            dimension_semantics=("parallel",)),   # batch tiles shard across TCs (v7x)
    )(x_tb, padded["wih"], padded["whh"], padded["bias"],
      padded["w1"], padded["b1"], padded["w2"], padded["b2"])
    return out[:B, :1]


def init_params(key, input_dim, lstm_h=LSTM_H, lin1_h=LIN1_H):
    """Deterministic synthetic parameters (PyTorch-style uniform init),
    stored pre-transposed for right-multiplication."""
    ks = jax.random.split(key, 8)
    k_lstm = 1.0 / jnp.sqrt(lstm_h)
    k_l1 = 1.0 / jnp.sqrt(lstm_h)
    k_l2 = 1.0 / jnp.sqrt(lin1_h)

    def u(k, shape, bound):
        return jax.random.uniform(k, shape, jnp.float32, -bound, bound)

    return {
        "wih_t": u(ks[0], (input_dim, 4 * lstm_h), k_lstm),   # W_ih^T (i,f,g,o cols)
        "whh_t": u(ks[1], (lstm_h, 4 * lstm_h), k_lstm),      # W_hh^T
        "bih":   u(ks[2], (1, 4 * lstm_h), k_lstm),
        "bhh":   u(ks[3], (1, 4 * lstm_h), k_lstm),
        "w1_t":  u(ks[4], (lstm_h, lin1_h), k_l1),            # Linear1.weight^T
        "b1":    u(ks[5], (1, lin1_h), k_l1),
        "w2_t":  u(ks[6], (lin1_h, 1), k_l2),                 # Linear2.weight^T
        "b2":    u(ks[7], (1, 1), k_l2),
    }


def pad_params(params, lstm_h=LSTM_H, lin1_h=LIN1_H, gp=GP):
    """Reorder gates PyTorch(i,f,g,o) -> kernel(i,f,o,g), zero-pad each gate
    to gp lanes, pad head weights to 128 lanes, and cast MXU operands to bf16.
    Zero padding keeps padded h/c lanes exactly zero."""
    gate_order = (0, 1, 3, 2)   # i, f, o, g  (from PyTorch's i, f, g, o)

    def pad_gate_cols(w):  # (..., 4H) -> (..., 4*gp), reordered
        parts = []
        for g in gate_order:
            blk = w[..., g * lstm_h:(g + 1) * lstm_h]
            pad_width = [(0, 0)] * (w.ndim - 1) + [(0, gp - lstm_h)]
            parts.append(jnp.pad(blk, pad_width))
        return jnp.concatenate(parts, axis=-1)

    wih = pad_gate_cols(params["wih_t"])                             # (D, 4*gp)
    whh = pad_gate_cols(params["whh_t"])                             # (H, 4*gp)
    whh = jnp.pad(whh, ((0, gp - lstm_h), (0, 0)))                   # (gp, 4*gp)
    bias = pad_gate_cols(params["bih"] + params["bhh"])              # (1, 4*gp)
    w1 = jnp.pad(params["w1_t"], ((0, gp - lstm_h), (0, 128 - lin1_h)))   # (gp, 128)
    b1 = jnp.pad(params["b1"], ((0, 0), (0, 128 - lin1_h)))          # (1, 128)
    w2 = jnp.pad(params["w2_t"].T, ((0, 0), (0, 128 - lin1_h)))      # (1, 128)
    return {
        "wih": wih.astype(jnp.bfloat16),
        "whh": whh.astype(jnp.bfloat16),
        "bias": bias,                       # f32 (added post-MXU)
        "w1": w1.astype(jnp.bfloat16),
        "b1": b1,
        "w2": w2,                           # f32 (VPU multiply + lane reduce)
        "b2": params["b2"],
    }


def _reference_forward(x, params):
    """Pure-JAX f32 reference mirroring the PyTorch forward (unpadded)."""
    B, T, _ = x.shape
    H = params["whh_t"].shape[0]
    bias = params["bih"] + params["bhh"]
    h = jnp.zeros((B, H), jnp.float32)
    c = jnp.zeros((B, H), jnp.float32)
    for t in range(T):
        gates = x[:, t, :] @ params["wih_t"] + h @ params["whh_t"] + bias
        i_g = jax.nn.sigmoid(gates[:, 0:H])
        f_g = jax.nn.sigmoid(gates[:, H:2 * H])
        g_g = jnp.tanh(gates[:, 2 * H:3 * H])
        o_g = jax.nn.sigmoid(gates[:, 3 * H:4 * H])
        c = f_g * c + i_g * g_g
        h = o_g * jnp.tanh(c)
    s1 = jax.nn.sigmoid(h @ params["w1_t"] + params["b1"])
    return s1 @ params["w2_t"] + params["b2"]


if __name__ == "__main__":
    # Small shapes consistent with the module: seq_len=8, input_dim=8,
    # LSTM hidden=40, Linear1 hidden=20, output=1.
    T, D = 8, 8
    key = jax.random.PRNGKey(0)
    k_x, k_p, k_x2 = jax.random.split(key, 3)

    params = init_params(k_p, input_dim=D)
    padded = pad_params(params)

    # Case 1: tiny batch (grid = 1 tile).
    B1 = 4
    x1 = jax.random.normal(k_x, (B1, T, D), jnp.float32)
    out1 = jax.block_until_ready(regressor_v1_forward(x1, padded))
    ref1 = _reference_forward(x1, params)
    assert out1.shape == (B1, 1)
    assert jnp.allclose(out1, ref1, rtol=1e-2, atol=1e-2), (out1, ref1)

    # Case 2: batch that pads and produces a >=2-step grid (multi-tile path).
    B2 = 20
    x2 = jax.random.normal(k_x2, (B2, T, D), jnp.float32)
    out2 = jax.block_until_ready(regressor_v1_forward(x2, padded))
    ref2 = _reference_forward(x2, params)
    assert out2.shape == (B2, 1)
    assert jnp.allclose(out2, ref2, rtol=1e-2, atol=1e-2), (out2, ref2)

    print("KERNEL_OK")
</pallas_src>

<mosaic_0001>
module attributes {stable_mosaic.version = 11 : i64} {
  func.func @_lstm_regressor_kernel(%arg0: i32, %arg1: memref<8x8x8xf32, #tpu.memory_space<vmem>>, %arg2: memref<8x512xbf16, #tpu.memory_space<vmem>>, %arg3: memref<128x512xbf16, #tpu.memory_space<vmem>>, %arg4: memref<1x512xf32, #tpu.memory_space<vmem>>, %arg5: memref<128x128xbf16, #tpu.memory_space<vmem>>, %arg6: memref<1x128xf32, #tpu.memory_space<vmem>>, %arg7: memref<1x128xf32, #tpu.memory_space<vmem>>, %arg8: memref<1x1xf32, #tpu.memory_space<vmem>>, %arg9: memref<8x128xf32, #tpu.memory_space<vmem>>, %arg10: memref<64x512xf32, #tpu.memory_space<vmem>>) attributes {dimension_semantics = [#tpu.dimension_semantics<parallel>], iteration_bounds = array<i64: 1>, scalar_prefetch = 0 : i64, scratch_operands = 1 : i64, tpu.core_type = #tpu.core_type<tc>, window_params = [{transform_indices = @transform_0, window_bounds = array<i64: 8, 8, 8>}, {pipeline_mode = #tpu.pipeline_mode<synchronous>, transform_indices = @transform_1, window_bounds = array<i64: 8, 512>}, {pipeline_mode = #tpu.pipeline_mode<synchronous>, transform_indices = @transform_2, window_bounds = array<i64: 128, 512>}, {pipeline_mode = #tpu.pipeline_mode<synchronous>, transform_indices = @transform_3, window_bounds = array<i64: 1, 512>}, {pipeline_mode = #tpu.pipeline_mode<synchronous>, transform_indices = @transform_4, window_bounds = array<i64: 128, 128>}, {pipeline_mode = #tpu.pipeline_mode<synchronous>, transform_indices = @transform_5, window_bounds = array<i64: 1, 128>}, {pipeline_mode = #tpu.pipeline_mode<synchronous>, transform_indices = @transform_6, window_bounds = array<i64: 1, 128>}, {pipeline_mode = #tpu.pipeline_mode<synchronous>, transform_indices = @transform_7, window_bounds = array<i64: 1, 1>}, {transform_indices = @transform_8, window_bounds = array<i64: 8, 128>}]} {
    %c0 = arith.constant 0 : index
    %c0_0 = arith.constant 0 : index
    %c0_1 = arith.constant 0 : index
    %0 = vector.load %arg1[%c0, %c0_0, %c0_1] : memref<8x8x8xf32, #tpu.memory_space<vmem>>, vector<8x8x8xf32>
    %1 = arith.truncf %0 : vector<8x8x8xf32> to vector<8x8x8xbf16>
    %2 = vector.shape_cast %1 : vector<8x8x8xbf16> to vector<64x8xbf16>
    %c0_2 = arith.constant 0 : index
    %c0_3 = arith.constant 0 : index
    %3 = vector.load %arg2[%c0_2, %c0_3] : memref<8x512xbf16, #tpu.memory_space<vmem>>, vector<8x512xbf16>
    %cst = arith.constant dense<0.000000e+00> : vector<64x512xf32>
    %4 = tpu.matmul %2, %3, %cst {dimension_numbers = #tpu.dot_dimension_numbers<[1], [0], [0], [1], [0, 0, 1, 1], [], []>} : vector<64x8xbf16>, vector<8x512xbf16>, vector<64x512xf32> -> vector<64x512xf32>
    %c0_4 = arith.constant 0 : index
    %c0_5 = arith.constant 0 : index
    %5 = vector.load %arg4[%c0_4, %c0_5] : memref<1x512xf32, #tpu.memory_space<vmem>>, vector<1x512xf32>
    %6 = vector.broadcast %5 : vector<1x512xf32> to vector<64x512xf32>
    %7 = arith.addf %4, %6 : vector<64x512xf32>
    %c0_6 = arith.constant 0 : index
    %c0_7 = arith.constant 0 : index
    %8 = vector.load %arg10[%c0_6, %c0_7] : memref<64x512xf32, #tpu.memory_space<vmem>>, vector<64x512xf32>
    tpu.vector_store %arg10[%c0_6, %c0_7], %7 {strides = array<i32>} : memref<64x512xf32, #tpu.memory_space<vmem>>, vector<64x512xf32>,
    %cst_8 = arith.constant 0.000000e+00 : f32
    %9 = vector.broadcast %cst_8 : f32 to vector<8x128xf32>
    %cst_9 = arith.constant 0.000000e+00 : f32
    %10 = vector.broadcast %cst_9 : f32 to vector<8x128xf32>
    %c0_10 = arith.constant 0 : index
    %c0_11 = arith.constant 0 : index
    %11 = vector.load %arg10[%c0_10, %c0_11] : memref<64x512xf32, #tpu.memory_space<vmem>>, vector<8x512xf32>
    %12 = arith.truncf %9 : vector<8x128xf32> to vector<8x128xbf16>
    %c0_12 = arith.constant 0 : index
    %c0_13 = arith.constant 0 : index
    %13 = vector.load %arg3[%c0_12, %c0_13] : memref<128x512xbf16, #tpu.memory_space<vmem>>, vector<128x512xbf16>
    %cst_14 = arith.constant dense<0.000000e+00> : vector<8x512xf32>
    %14 = tpu.matmul %12, %13, %cst_14 {dimension_numbers = #tpu.dot_dimension_numbers<[1], [0], [0], [1], [0, 0, 1, 1], [], []>} : vector<8x128xbf16>, vector<128x512xbf16>, vector<8x512xf32> -> vector<8x512xf32>
    %15 = arith.addf %11, %14 : vector<8x512xf32>
    %16 = vector.extract_strided_slice %15 {offsets = [0, 0], sizes = [8, 384], strides = [1, 1]} : vector<8x512xf32> to vector<8x384xf32>
    %17 = arith.negf %16 : vector<8x384xf32>
    %18 = math.exp %17 : vector<8x384xf32>
    %cst_15 = arith.constant 1.000000e+00 : f32
    %19 = vector.broadcast %cst_15 : f32 to vector<8x384xf32>
    %20 = arith.addf %19, %18 : vector<8x384xf32>
    %21 = arith.divf %19, %20 : vector<8x384xf32>
    %22 = vector.extract_strided_slice %15 {offsets = [0, 384], sizes = [8, 128], strides = [1, 1]} : vector<8x512xf32> to vector<8x128xf32>
    %23 = math.tanh %22 : vector<8x128xf32>
    %24 = vector.extract_strided_slice %21 {offsets = [0, 0], sizes = [8, 128], strides = [1, 1]} : vector<8x384xf32> to vector<8x128xf32>
    %25 = vector.extract_strided_slice %21 {offsets = [0, 128], sizes = [8, 128], strides = [1, 1]} : vector<8x384xf32> to vector<8x128xf32>
    %26 = vector.extract_strided_slice %21 {offsets = [0, 256], sizes = [8, 128], strides = [1, 1]} : vector<8x384xf32> to vector<8x128xf32>
    %27 = arith.mulf %25, %10 : vector<8x128xf32>
    %28 = arith.mulf %24, %23 : vector<8x128xf32>
    %29 = arith.addf %27, %28 : vector<8x128xf32>
    %30 = math.tanh %29 : vector<8x128xf32>
    %31 = arith.mulf %26, %30 : vector<8x128xf32>
    %c8 = arith.constant 8 : index
    %c0_16 = arith.constant 0 : index
    %32 = vector.load %arg10[%c8, %c0_16] : memref<64x512xf32, #tpu.memory_space<vmem>>, vector<8x512xf32>
    %33 = arith.truncf %31 : vector<8x128xf32> to vector<8x128xbf16>
    %c0_17 = arith.constant 0 : index
    %c0_18 = arith.constant 0 : index
    %34 = vector.load %arg3[%c0_17, %c0_18] : memref<128x512xbf16, #tpu.memory_space<vmem>>, vector<128x512xbf16>
    %cst_19 = arith.constant dense<0.000000e+00> : vector<8x512xf32>
    %35 = tpu.matmul %33, %34, %cst_19 {dimension_numbers = #tpu.dot_dimension_numbers<[1], [0], [0], [1], [0, 0, 1, 1], [], []>} : vector<8x128xbf16>, vector<128x512xbf16>, vector<8x512xf32> -> vector<8x512xf32>
    %36 = arith.addf %32, %35 : vector<8x512xf32>
    %37 = vector.extract_strided_slice %36 {offsets = [0, 0], sizes = [8, 384], strides = [1, 1]} : vector<8x512xf32> to vector<8x384xf32>
    %38 = arith.negf %37 : vector<8x384xf32>
    %39 = math.exp %38 : vector<8x384xf32>
    %cst_20 = arith.constant 1.000000e+00 : f32
    %40 = vector.broadcast %cst_20 : f32 to vector<8x384xf32>
    %41 = arith.addf %40, %39 : vector<8x384xf32>
    %42 = arith.divf %40, %41 : vector<8x384xf32>
    %43 = vector.extract_strided_slice %36 {offsets = [0, 384], sizes = [8, 128], strides = [1, 1]} : vector<8x512xf32> to vector<8x128xf32>
    %44 = math.tanh %43 : vector<8x128xf32>
    %45 = vector.extract_strided_slice %42 {offsets = [0, 0], sizes = [8, 128], strides = [1, 1]} : vector<8x384xf32> to vector<8x128xf32>
    %46 = vector.extract_strided_slice %42 {offsets = [0, 128], sizes = [8, 128], strides = [1, 1]} : vector<8x384xf32> to vector<8x128xf32>
    %47 = vector.extract_strided_slice %42 {offsets = [0, 256], sizes = [8, 128], strides = [1, 1]} : vector<8x384xf32> to vector<8x128xf32>
    %48 = arith.mulf %46, %29 : vector<8x128xf32>
    %49 = arith.mulf %45, %44 : vector<8x128xf32>
    %50 = arith.addf %48, %49 : vector<8x128xf32>
    %51 = math.tanh %50 : vector<8x128xf32>
    %52 = arith.mulf %47, %51 : vector<8x128xf32>
    %c16 = arith.constant 16 : index
    %c0_21 = arith.constant 0 : index
    %53 = vector.load %arg10[%c16, %c0_21] : memref<64x512xf32, #tpu.memory_space<vmem>>, vector<8x512xf32>
    %54 = arith.truncf %52 : vector<8x128xf32> to vector<8x128xbf16>
    %c0_22 = arith.constant 0 : index
    %c0_23 = arith.constant 0 : index
    %55 = vector.load %arg3[%c0_22, %c0_23] : memref<128x512xbf16, #tpu.memory_space<vmem>>, vector<128x512xbf16>
    %cst_24 = arith.constant dense<0.000000e+00> : vector<8x512xf32>
    %56 = tpu.matmul %54, %55, %cst_24 {dimension_numbers = #tpu.dot_dimension_numbers<[1], [0], [0], [1], [0, 0, 1, 1], [], []>} : vector<8x128xbf16>, vector<128x512xbf16>, vector<8x512xf32> -> vector<8x512xf32>
    %57 = arith.addf %53, %56 : vector<8x512xf32>
    %58 = vector.extract_strided_slice %57 {offsets = [0, 0], sizes = [8, 384], strides = [1, 1]} : vector<8x512xf32> to vector<8x384xf32>
    %59 = arith.negf %58 : vector<8x384xf32>
    %60 = math.exp %59 : vector<8x384xf32>
    %cst_25 = arith.constant 1.000000e+00 : f32
    %61 = vector.broadcast %cst_25 : f32 to vector<8x384xf32>
    %62 = arith.addf %61, %60 : vector<8x384xf32>
    %63 = arith.divf %61, %62 : vector<8x384xf32>
    %64 = vector.extract_strided_slice %57 {offsets = [0, 384], sizes = [8, 128], strides = [1, 1]} : vector<8x512xf32> to vector<8x128xf32>
    %65 = math.tanh %64 : vector<8x128xf32>
    %66 = vector.extract_strided_slice %63 {offsets = [0, 0], sizes = [8, 128], strides = [1, 1]} : vector<8x384xf32> to vector<8x128xf32>
    %67 = vector.extract_strided_slice %63 {offsets = [0, 128], sizes = [8, 128], strides = [1, 1]} : vector<8x384xf32> to vector<8x128xf32>
    %68 = vector.extract_strided_slice %63 {offsets = [0, 256], sizes = [8, 128], strides = [1, 1]} : vector<8x384xf32> to vector<8x128xf32>
    %69 = arith.mulf %67, %50 : vector<8x128xf32>
    %70 = arith.mulf %66, %65 : vector<8x128xf32>
    %71 = arith.addf %69, %70 : vector<8x128xf32>
    %72 = math.tanh %71 : vector<8x128xf32>
    %73 = arith.mulf %68, %72 : vector<8x128xf32>
    %c24 = arith.constant 24 : index
    %c0_26 = arith.constant 0 : index
    %74 = vector.load %arg10[%c24, %c0_26] : memref<64x512xf32, #tpu.memory_space<vmem>>, vector<8x512xf32>
    %75 = arith.truncf %73 : vector<8x128xf32> to vector<8x128xbf16>
    %c0_27 = arith.constant 0 : index
    %c0_28 = arith.constant 0 : index
    %76 = vector.load %arg3[%c0_27, %c0_28] : memref<128x512xbf16, #tpu.memory_space<vmem>>, vector<128x512xbf16>
    %cst_29 = arith.constant dense<0.000000e+00> : vector<8x512xf32>
    %77 = tpu.matmul %75, %76, %cst_29 {dimension_numbers = #tpu.dot_dimension_numbers<[1], [0], [0], [1], [0, 0, 1, 1], [], []>} : vector<8x128xbf16>, vector<128x512xbf16>, vector<8x512xf32> -> vector<8x512xf32>
    %78 = arith.addf %74, %77 : vector<8x512xf32>
    %79 = vector.extract_strided_slice %78 {offsets = [0, 0], sizes = [8, 384], strides = [1, 1]} : vector<8x512xf32> to vector<8x384xf32>
    %80 = arith.negf %79 : vector<8x384xf32>
    %81 = math.exp %80 : vector<8x384xf32>
    %cst_30 = arith.constant 1.000000e+00 : f32
    %82 = vector.broadcast %cst_30 : f32 to vector<8x384xf32>
    %83 = arith.addf %82, %81 : vector<8x384xf32>
    %84 = arith.divf %82, %83 : vector<8x384xf32>
    %85 = vector.extract_strided_slice %78 {offsets = [0, 384], sizes = [8, 128], strides = [1, 1]} : vector<8x512xf32> to vector<8x128xf32>
    %86 = math.tanh %85 : vector<8x128xf32>
    %87 = vector.extract_strided_slice %84 {offsets = [0, 0], sizes = [8, 128], strides = [1, 1]} : vector<8x384xf32> to vector<8x128xf32>
    %88 = vector.extract_strided_slice %84 {offsets = [0, 128], sizes = [8, 128], strides = [1, 1]} : vector<8x384xf32> to vector<8x128xf32>
    %89 = vector.extract_strided_slice %84 {offsets = [0, 256], sizes = [8, 128], strides = [1, 1]} : vector<8x384xf32> to vector<8x128xf32>
    %90 = arith.mulf %88, %71 : vector<8x128xf32>
    %91 = arith.mulf %87, %86 : vector<8x128xf32>
    %92 = arith.addf %90, %91 : vector<8x128xf32>
    %93 = math.tanh %92 : vector<8x128xf32>
    %94 = arith.mulf %89, %93 : vector<8x128xf32>
    %c32 = arith.constant 32 : index
    %c0_31 = arith.constant 0 : index
    %95 = vector.load %arg10[%c32, %c0_31] : memref<64x512xf32, #tpu.memory_space<vmem>>, vector<8x512xf32>
    %96 = arith.truncf %94 : vector<8x128xf32> to vector<8x128xbf16>
    %c0_32 = arith.constant 0 : index
    %c0_33 = arith.constant 0 : index
    %97 = vector.load %arg3[%c0_32, %c0_33] : memref<128x512xbf16, #tpu.memory_space<vmem>>, vector<128x512xbf16>
    %cst_34 = arith.constant dense<0.000000e+00> : vector<8x512xf32>
    %98 = tpu.matmul %96, %97, %cst_34 {dimension_numbers = #tpu.dot_dimension_numbers<[1], [0], [0], [1], [0, 0, 1, 1], [], []>} : vector<8x128xbf16>, vector<128x512xbf16>, vector<8x512xf32> -> vector<8x512xf32>
    %99 = arith.addf %95, %98 : vector<8x512xf32>
    %100 = vector.extract_strided_slice %99 {offsets = [0, 0], sizes = [8, 384], strides = [1, 1]} : vector<8x512xf32> to vector<8x384xf32>
    %101 = arith.negf %100 : vector<8x384xf32>
    %102 = math.exp %101 : vector<8x384xf32>
    %cst_35 = arith.constant 1.000000e+00 : f32
    %103 = vector.broadcast %cst_35 : f32 to vector<8x384xf32>
    %104 = arith.addf %103, %102 : vector<8x384xf32>
    %105 = arith.divf %103, %104 : vector<8x384xf32>
    %106 = vector.extract_strided_slice %99 {offsets = [0, 384], sizes = [8, 128], strides = [1, 1]} : vector<8x512xf32> to vector<8x128xf32>
    %107 = math.tanh %106 : vector<8x128xf32>
    %108 = vector.extract_strided_slice %105 {offsets = [0, 0], sizes = [8, 128], strides = [1, 1]} : vector<8x384xf32> to vector<8x128xf32>
    %109 = vector.extract_strided_slice %105 {offsets = [0, 128], sizes = [8, 128], strides = [1, 1]} : vector<8x384xf32> to vector<8x128xf32>
    %110 = vector.extract_strided_slice %105 {offsets = [0, 256], sizes = [8, 128], strides = [1, 1]} : vector<8x384xf32> to vector<8x128xf32>
    %111 = arith.mulf %109, %92 : vector<8x128xf32>
    %112 = arith.mulf %108, %107 : vector<8x128xf32>
    %113 = arith.addf %111, %112 : vector<8x128xf32>
    %114 = math.tanh %113 : vector<8x128xf32>
    %115 = arith.mulf %110, %114 : vector<8x128xf32>
    %c40 = arith.constant 40 : index
    %c0_36 = arith.constant 0 : index
    %116 = vector.load %arg10[%c40, %c0_36] : memref<64x512xf32, #tpu.memory_space<vmem>>, vector<8x512xf32>
    %117 = arith.truncf %115 : vector<8x128xf32> to vector<8x128xbf16>
    %c0_37 = arith.constant 0 : index
    %c0_38 = arith.constant 0 : index
    %118 = vector.load %arg3[%c0_37, %c0_38] : memref<128x512xbf16, #tpu.memory_space<vmem>>, vector<128x512xbf16>
    %cst_39 = arith.constant dense<0.000000e+00> : vector<8x512xf32>
    %119 = tpu.matmul %117, %118, %cst_39 {dimension_numbers = #tpu.dot_dimension_numbers<[1], [0], [0], [1], [0, 0, 1, 1], [], []>} : vector<8x128xbf16>, vector<128x512xbf16>, vector<8x512xf32> -> vector<8x512xf32>
    %120 = arith.addf %116, %119 : vector<8x512xf32>
    %121 = vector.extract_strided_slice %120 {offsets = [0, 0], sizes = [8, 384], strides = [1, 1]} : vector<8x512xf32> to vector<8x384xf32>
    %122 = arith.negf %121 : vector<8x384xf32>
    %123 = math.exp %122 : vector<8x384xf32>
    %cst_40 = arith.constant 1.000000e+00 : f32
    %124 = vector.broadcast %cst_40 : f32 to vector<8x384xf32>
    %125 = arith.addf %124, %123 : vector<8x384xf32>
    %126 = arith.divf %124, %125 : vector<8x384xf32>
    %127 = vector.extract_strided_slice %120 {offsets = [0, 384], sizes = [8, 128], strides = [1, 1]} : vector<8x512xf32> to vector<8x128xf32>
    %128 = math.tanh %127 : vector<8x128xf32>
    %129 = vector.extract_strided_slice %126 {offsets = [0, 0], sizes = [8, 128], strides = [1, 1]} : vector<8x384xf32> to vector<8x128xf32>
    %130 = vector.extract_strided_slice %126 {offsets = [0, 128], sizes = [8, 128], strides = [1, 1]} : vector<8x384xf32> to vector<8x128xf32>
    %131 = vector.extract_strided_slice %126 {offsets = [0, 256], sizes = [8, 128], strides = [1, 1]} : vector<8x384xf32> to vector<8x128xf32>
    %132 = arith.mulf %130, %113 : vector<8x128xf32>
    %133 = arith.mulf %129, %128 : vector<8x128xf32>
    %134 = arith.addf %132, %133 : vector<8x128xf32>
    %135 = math.tanh %134 : vector<8x128xf32>
    %136 = arith.mulf %131, %135 : vector<8x128xf32>
    %c48 = arith.constant 48 : index
    %c0_41 = arith.constant 0 : index
    %137 = vector.load %arg10[%c48, %c0_41] : memref<64x512xf32, #tpu.memory_space<vmem>>, vector<8x512xf32>
    %138 = arith.truncf %136 : vector<8x128xf32> to vector<8x128xbf16>
    %c0_42 = arith.constant 0 : index
    %c0_43 = arith.constant 0 : index
    %139 = vector.load %arg3[%c0_42, %c0_43] : memref<128x512xbf16, #tpu.memory_space<vmem>>, vector<128x512xbf16>
    %cst_44 = arith.constant dense<0.000000e+00> : vector<8x512xf32>
    %140 = tpu.matmul %138, %139, %cst_44 {dimension_numbers = #tpu.dot_dimension_numbers<[1], [0], [0], [1], [0, 0, 1, 1], [], []>} : vector<8x128xbf16>, vector<128x512xbf16>, vector<8x512xf32> -> vector<8x512xf32>
    %141 = arith.addf %137, %140 : vector<8x512xf32>
    %142 = vector.extract_strided_slice %141 {offsets = [0, 0], sizes = [8, 384], strides = [1, 1]} : vector<8x512xf32> to vector<8x384xf32>
    %143 = arith.negf %142 : vector<8x384xf32>
    %144 = math.exp %143 : vector<8x384xf32>
    %cst_45 = arith.constant 1.000000e+00 : f32
    %145 = vector.broadcast %cst_45 : f32 to vector<8x384xf32>
    %146 = arith.addf %145, %144 : vector<8x384xf32>
    %147 = arith.divf %145, %146 : vector<8x384xf32>
    %148 = vector.extract_strided_slice %141 {offsets = [0, 384], sizes = [8, 128], strides = [1, 1]} : vector<8x512xf32> to vector<8x128xf32>
    %149 = math.tanh %148 : vector<8x128xf32>
    %150 = vector.extract_strided_slice %147 {offsets = [0, 0], sizes = [8, 128], strides = [1, 1]} : vector<8x384xf32> to vector<8x128xf32>
    %151 = vector.extract_strided_slice %147 {offsets = [0, 128], sizes = [8, 128], strides = [1, 1]} : vector<8x384xf32> to vector<8x128xf32>
    %152 = vector.extract_strided_slice %147 {offsets = [0, 256], sizes = [8, 128], strides = [1, 1]} : vector<8x384xf32> to vector<8x128xf32>
    %153 = arith.mulf %151, %134 : vector<8x128xf32>
    %154 = arith.mulf %150, %149 : vector<8x128xf32>
    %155 = arith.addf %153, %154 : vector<8x128xf32>
    %156 = math.tanh %155 : vector<8x128xf32>
    %157 = arith.mulf %152, %156 : vector<8x128xf32>
    %c56 = arith.constant 56 : index
    %c0_46 = arith.constant 0 : index
    %158 = vector.load %arg10[%c56, %c0_46] : memref<64x512xf32, #tpu.memory_space<vmem>>, vector<8x512xf32>
    %159 = arith.truncf %157 : vector<8x128xf32> to vector<8x128xbf16>
    %c0_47 = arith.constant 0 : index
    %c0_48 = arith.constant 0 : index
    %160 = vector.load %arg3[%c0_47, %c0_48] : memref<128x512xbf16, #tpu.memory_space<vmem>>, vector<128x512xbf16>
    %cst_49 = arith.constant dense<0.000000e+00> : vector<8x512xf32>
    %161 = tpu.matmul %159, %160, %cst_49 {dimension_numbers = #tpu.dot_dimension_numbers<[1], [0], [0], [1], [0, 0, 1, 1], [], []>} : vector<8x128xbf16>, vector<128x512xbf16>, vector<8x512xf32> -> vector<8x512xf32>
    %162 = arith.addf %158, %161 : vector<8x512xf32>
    %163 = vector.extract_strided_slice %162 {offsets = [0, 0], sizes = [8, 384], strides = [1, 1]} : vector<8x512xf32> to vector<8x384xf32>
    %164 = arith.negf %163 : vector<8x384xf32>
    %165 = math.exp %164 : vector<8x384xf32>
    %cst_50 = arith.constant 1.000000e+00 : f32
    %166 = vector.broadcast %cst_50 : f32 to vector<8x384xf32>
    %167 = arith.addf %166, %165 : vector<8x384xf32>
    %168 = arith.divf %166, %167 : vector<8x384xf32>
    %169 = vector.extract_strided_slice %162 {offsets = [0, 384], sizes = [8, 128], strides = [1, 1]} : vector<8x512xf32> to vector<8x128xf32>
    %170 = math.tanh %169 : vector<8x128xf32>
    %171 = vector.extract_strided_slice %168 {offsets = [0, 0], sizes = [8, 128], strides = [1, 1]} : vector<8x384xf32> to vector<8x128xf32>
    %172 = vector.extract_strided_slice %168 {offsets = [0, 128], sizes = [8, 128], strides = [1, 1]} : vector<8x384xf32> to vector<8x128xf32>
    %173 = vector.extract_strided_slice %168 {offsets = [0, 256], sizes = [8, 128], strides = [1, 1]} : vector<8x384xf32> to vector<8x128xf32>
    %174 = arith.mulf %172, %155 : vector<8x128xf32>
    %175 = arith.mulf %171, %170 : vector<8x128xf32>
    %176 = arith.addf %174, %175 : vector<8x128xf32>
    %177 = math.tanh %176 : vector<8x128xf32>
    %178 = arith.mulf %173, %177 : vector<8x128xf32>
    %179 = arith.truncf %178 : vector<8x128xf32> to vector<8x128xbf16>
    %c0_51 = arith.constant 0 : index
    %c0_52 = arith.constant 0 : index
    %180 = vector.load %arg5[%c0_51, %c0_52] : memref<128x128xbf16, #tpu.memory_space<vmem>>, vector<128x128xbf16>
    %cst_53 = arith.constant dense<0.000000e+00> : vector<8x128xf32>
    %181 = tpu.matmul %179, %180, %cst_53 {dimension_numbers = #tpu.dot_dimension_numbers<[1], [0], [0], [1], [0, 0, 1, 1], [], []>} : vector<8x128xbf16>, vector<128x128xbf16>, vector<8x128xf32> -> vector<8x128xf32>
    %c0_54 = arith.constant 0 : index
    %c0_55 = arith.constant 0 : index
    %182 = vector.load %arg6[%c0_54, %c0_55] : memref<1x128xf32, #tpu.memory_space<vmem>>, vector<1x128xf32>
    %183 = vector.broadcast %182 : vector<1x128xf32> to vector<8x128xf32>
    %184 = arith.addf %181, %183 : vector<8x128xf32>
    %185 = arith.negf %184 : vector<8x128xf32>
    %186 = math.exp %185 : vector<8x128xf32>
    %cst_56 = arith.constant 1.000000e+00 : f32
    %187 = vector.broadcast %cst_56 : f32 to vector<8x128xf32>
    %188 = arith.addf %187, %186 : vector<8x128xf32>
    %189 = arith.divf %187, %188 : vector<8x128xf32>
    %c0_57 = arith.constant 0 : index
    %c0_58 = arith.constant 0 : index
    %190 = vector.load %arg7[%c0_57, %c0_58] : memref<1x128xf32, #tpu.memory_space<vmem>>, vector<1x128xf32>
    %191 = vector.broadcast %190 : vector<1x128xf32> to vector<8x128xf32>
    %192 = arith.mulf %189, %191 : vector<8x128xf32>
    %cst_59 = arith.constant dense<0.000000e+00> : vector<8xf32>
    %193 = vector.multi_reduction <add>, %192, %cst_59 [1] : vector<8x128xf32> to vector<8xf32>
    %194 = vector.shape_cast %193 : vector<8xf32> to vector<8x1xf32>
    %c0_60 = arith.constant 0 : index
    %c0_61 = arith.constant 0 : index
    %195 = vector.load %arg8[%c0_60, %c0_61] : memref<1x1xf32, #tpu.memory_space<vmem>>, vector<1x1xf32>
    %196 = vector.broadcast %195 : vector<1x1xf32> to vector<8x1xf32>
    %197 = arith.addf %194, %196 : vector<8x1xf32>
    %198 = vector.shape_cast %197 : vector<8x1xf32> to vector<8x1xf32>
    %199 = vector.broadcast %198 : vector<8x1xf32> to vector<8x128xf32>
    %c0_62 = arith.constant 0 : index
    %c0_63 = arith.constant 0 : index
    %200 = vector.load %arg9[%c0_62, %c0_63] : memref<8x128xf32, #tpu.memory_space<vmem>>, vector<8x128xf32>
    tpu.vector_store %arg9[%c0_62, %c0_63], %199 {strides = array<i32>} : memref<8x128xf32, #tpu.memory_space<vmem>>, vector<8x128xf32>,
    return
  }
  func.func @transform_0(%arg0: i32) -> (i32, i32, i32) {
    %c0_i32 = arith.constant 0 : i32
    %c0_i32_0 = arith.constant 0 : i32
    %c0_i32_1 = arith.constant 0 : i32
    return %c0_i32, %arg0, %c0_i32_0 : i32, i32, i32
  }
  func.func @transform_1(%arg0: i32) -> (i32, i32) {
    %c0_i32 = arith.constant 0 : i32
    %c0_i32_0 = arith.constant 0 : i32
    %c0_i32_1 = arith.constant 0 : i32
    return %c0_i32, %c0_i32_0 : i32, i32
  }
  func.func @transform_2(%arg0: i32) -> (i32, i32) {
    %c0_i32 = arith.constant 0 : i32
    %c0_i32_0 = arith.constant 0 : i32
    %c0_i32_1 = arith.constant 0 : i32
    return %c0_i32, %c0_i32_0 : i32, i32
  }
  func.func @transform_3(%arg0: i32) -> (i32, i32) {
    %c0_i32 = arith.constant 0 : i32
    %c0_i32_0 = arith.constant 0 : i32
    %c0_i32_1 = arith.constant 0 : i32
    return %c0_i32, %c0_i32_0 : i32, i32
  }
  func.func @transform_4(%arg0: i32) -> (i32, i32) {
    %c0_i32 = arith.constant 0 : i32
    %c0_i32_0 = arith.constant 0 : i32
    %c0_i32_1 = arith.constant 0 : i32
    return %c0_i32, %c0_i32_0 : i32, i32
  }
  func.func @transform_5(%arg0: i32) -> (i32, i32) {
    %c0_i32 = arith.constant 0 : i32
    %c0_i32_0 = arith.constant 0 : i32
    %c0_i32_1 = arith.constant 0 : i32
    return %c0_i32, %c0_i32_0 : i32, i32
  }
  func.func @transform_6(%arg0: i32) -> (i32, i32) {
    %c0_i32 = arith.constant 0 : i32
    %c0_i32_0 = arith.constant 0 : i32
    %c0_i32_1 = arith.constant 0 : i32
    return %c0_i32, %c0_i32_0 : i32, i32
  }
  func.func @transform_7(%arg0: i32) -> (i32, i32) {
    %c0_i32 = arith.constant 0 : i32
    %c0_i32_0 = arith.constant 0 : i32
    %c0_i32_1 = arith.constant 0 : i32
    return %c0_i32, %c0_i32_0 : i32, i32
  }
  func.func @transform_8(%arg0: i32) -> (i32, i32) {
    %c0_i32 = arith.constant 0 : i32
    %c0_i32_0 = arith.constant 0 : i32
    return %arg0, %c0_i32 : i32, i32
  }
}

</mosaic_0001>

<llo_original>
// kernel: regressor_v1_forward.1
$region0: #{regressor_v1_forward.1}
  #allocation0 [shape = 'u32[]', space=smem, size = 0x4, offset = 0x4, fixed_abs, tag = 'smem constant byte address 0x4 - core index']
  #allocation1 [shape = 'u32[144,128]{1,0:T(1,128)}', space=vmem, size = 0x12000, scoped, tag = 'internal scratch']
  #allocation2 [shape = 'f32[64,512]{1,0:T(8,128)}', space=vmem, size = 0x20000, scoped, tag = 'scratch operand']
  #allocation3 [shape = 'f32[1,1]{1,0:T(1,128)S(1)}', space=vmem, size = 0x200, scoped, tag = 'scoped memory for regressor_v1_forward.1']
  %s0 = inlined_call_operand.vmem [shape: f32[8,8,8], index: 0, kind: input, shape index: {}]
  %s1 = inlined_call_operand.vmem [shape: bf16[8,512], index: 1, kind: input, shape index: {}]
  %s2 = inlined_call_operand.hbm [shape: bf16[128,512], index: 2, kind: input, shape index: {}]
  %s3 = inlined_call_operand.vmem [shape: f32[1,512], index: 3, kind: input, shape index: {}]
  %s4 = inlined_call_operand.vmem [shape: bf16[128,128], index: 4, kind: input, shape index: {}]
  %s5 = inlined_call_operand.vmem [shape: f32[1,128], index: 5, kind: input, shape index: {}]
  %s6 = inlined_call_operand.vmem [shape: f32[1,128], index: 6, kind: input, shape index: {}]
  %s7 = inlined_call_operand.<no memory space> [shape: f32[1,1], index: 7, kind: input, shape index: {}]
  %s8 = inlined_call_operand.vmem [shape: f32[8,128], index: 8, kind: output, shape index: {}]
  %s9 = sld [smem:[#allocation0]]
  $region46: #{regressor_v1_forward.1} parent=0
    _
  %s11 = ssub.s32 1, %s9
  %s12 = scalar_select 0, %s11, %s9
  %v13 = vstv %s7
  %14 = vst [vmem:[#allocation3] sm:$0x1] %v13
  $region1: #{regressor_v1_forward.1} parent=0
    #allocation4 [shape = 'u8[131072]{0}', space=vmem, size = 0x20000, scoped, tag = 'input window, operand 2, single buffered']
    #allocation5 [shape = 's32[1]{0}', space=sflag, size = 0x4, scoped, tag = 'scoped memory for regressor_v1_forward.1']
    %15 = vsyncpa [#allocation5], 0
    // Predicated region
    $region2: #{regressor_v1_forward.1} parent=1 // pred_check
      _
    $region3: #{regressor_v1_forward.1} parent=1 // pred_check_branch
      %17 = sbr.rel (0) target = $region5
    $region4: #{regressor_v1_forward.1} parent=1 // pred_region
      _
    $region5: #{regressor_v1_forward.1} parent=1 // pred_fallthru
      _
    // Predicated region
    $region6: #{regressor_v1_forward.1} parent=1 // pred_check
      _
    $region7: #{regressor_v1_forward.1} parent=1 // pred_check_branch
      %19 = sbr.rel (0) target = $region9
    $region8: #{regressor_v1_forward.1} parent=1 // pred_region
      _
    $region9: #{regressor_v1_forward.1} parent=1 // pred_fallthru
      _
    // Predicated region
    $region10: #{regressor_v1_forward.1} parent=1 // pred_check
      _
    $region11: #{regressor_v1_forward.1} parent=1 // pred_check_branch
      %21 = sbr.rel (0) target = $region13
    $region12: #{regressor_v1_forward.1} parent=1 // pred_region
      %s23 = ssub.s32 4096, 4096
      %24 = vsyncadd [#allocation5], %s23
      %s25 = sshll.u32 [#allocation4], 4
      %s26 = int_to_ptr.vmem [resolvable:$true] %s25
      %31 = dma.hbm_to_vmem [thread:$0]  %s2, 4096, %s26, [#allocation5], 256, 256, 16
    $region13: #{regressor_v1_forward.1} parent=1 // pred_fallthru
      _
    // Predicated region
    $region14: #{regressor_v1_forward.1} parent=1 // pred_check
      _
    $region15: #{regressor_v1_forward.1} parent=1 // pred_check_branch
      %33 = sbr.rel (0) target = $region17
    $region16: #{regressor_v1_forward.1} parent=1 // pred_region
      _
    $region17: #{regressor_v1_forward.1} parent=1 // pred_fallthru
      _
    // Predicated region
    $region18: #{regressor_v1_forward.1} parent=1 // pred_check
      _
    $region19: #{regressor_v1_forward.1} parent=1 // pred_check_branch
      %35 = sbr.rel (0) target = $region21
    $region20: #{regressor_v1_forward.1} parent=1 // pred_region
      _
    $region21: #{regressor_v1_forward.1} parent=1 // pred_fallthru
      _
    // Predicated region
    $region22: #{regressor_v1_forward.1} parent=1 // pred_check
      _
    $region23: #{regressor_v1_forward.1} parent=1 // pred_check_branch
      %37 = sbr.rel (0) target = $region25
    $region24: #{regressor_v1_forward.1} parent=1 // pred_region
      _
    $region25: #{regressor_v1_forward.1} parent=1 // pred_fallthru
      _
    // Predicated region
    $region26: #{regressor_v1_forward.1} parent=1 // pred_check
      _
    $region27: #{regressor_v1_forward.1} parent=1 // pred_check_branch
      %39 = sbr.rel (0) target = $region29
    $region28: #{regressor_v1_forward.1} parent=1 // pred_region
      _
    $region29: #{regressor_v1_forward.1} parent=1 // pred_fallthru
      _
    // Predicated region
    $region30: #{regressor_v1_forward.1} parent=1 // pred_check
      _
    $region31: #{regressor_v1_forward.1} parent=1 // pred_check_branch
      %41 = sbr.rel (0) target = $region33
    $region32: #{regressor_v1_forward.1} parent=1 // pred_region
      _
    $region33: #{regressor_v1_forward.1} parent=1 // pred_fallthru
      _
    // Predicated region
    $region34: #{regressor_v1_forward.1} parent=1 // pred_check
      _
    $region35: #{regressor_v1_forward.1} parent=1 // pred_check_branch
      %43 = sbr.rel (0) target = $region37
    $region36: #{regressor_v1_forward.1} parent=1 // pred_region
      %44 = dma.done [#allocation5], 4096
    $region37: #{regressor_v1_forward.1} parent=1 // pred_fallthru
      _
    %v46 = vld [vmem:[%s0] sm:$0xff]
    %v47 = vld [vmem:[%s0 + $0x8] sm:$0xff]
    %v48 = vld [vmem:[%s0 + $0x10] sm:$0xff]
    %v49 = vld [vmem:[%s0 + $0x18] sm:$0xff]
    %v50 = vld [vmem:[%s0 + $0x20] sm:$0xff]
    %v51 = vld [vmem:[%s0 + $0x28] sm:$0xff]
    %v52 = vld [vmem:[%s0 + $0x30] sm:$0xff]
    %v53 = vld [vmem:[%s0 + $0x38] sm:$0xff]
    %v54 = vpack.c.bf16 %v46, %v46
    %v55 = vpack.c.bf16 %v47, %v47
    %v56 = vpack.c.bf16 %v48, %v48
    %v57 = vpack.c.bf16 %v49, %v49
    %v58 = vpack.c.bf16 %v50, %v50
    %v59 = vpack.c.bf16 %v51, %v51
    %v60 = vpack.c.bf16 %v52, %v52
    %v61 = vpack.c.bf16 %v53, %v53
    %v62 = vld [vmem:[%s1] sm:$0xff]
    %v63 = vld [vmem:[%s1 + $0x8] sm:$0xff]
    %v64 = vld [vmem:[%s3] sm:$0xf]
    %v66 = vlaneseq
    %v67 = vshrl.u32 %v66, 7
    %v68 = vsub.s32 0, %v67
    %v69 = vrot.slane %v64, %v68
    %v70 = vlaneseq
    %v71 = vshrl.u32 %v70, 7
    %v72 = vsub.s32 1, %v71
    %v73 = vrot.slane %v64, %v72
    %v74 = vlaneseq
    %v75 = vshrl.u32 %v74, 7
    %v76 = vsub.s32 2, %v75
    %v77 = vrot.slane %v64, %v76
    %v78 = vlaneseq
    %v79 = vshrl.u32 %v78, 7
    %v80 = vsub.s32 3, %v79
    %v81 = vrot.slane %v64, %v80
    %v94 = vunpack.c.l.b16 %v54
    %v95 = vunpack.c.l.b16 %v55
    %v96 = vunpack.c.l.b16 %v56
    %v97 = vunpack.c.l.b16 %v57
    %v98 = vunpack.c.l.b16 %v58
    %v99 = vunpack.c.l.b16 %v59
    %v100 = vunpack.c.l.b16 %v60
    %v101 = vunpack.c.l.b16 %v61
    %v102 = vpack.c.b16 %v95, %v94
    %v103 = vpack.c.b16 %v97, %v96
    %v104 = vpack.c.b16 %v99, %v98
    %v105 = vpack.c.b16 %v101, %v100
    %v108 = vunpack.c.l.b16 %v62
    %v109 = vunpack.c.h.b16 %v62
    %v110 = vunpack.c.l.b16 %v63
    %v111 = vunpack.c.h.b16 %v63
    %v112 = vpack.c.b16 %v108, %v108
    %v113 = vpack.c.b16 %v109, %v109
    %v114 = vpack.c.b16 %v110, %v110
    %v115 = vpack.c.b16 %v111, %v111
    %vm116 = vcmask 64512
    %v118 = vsel %vm116, %v102, 0
    %v121 = vsel %vm116, %v103, 0
    %v124 = vsel %vm116, %v104, 0
    %v127 = vsel %vm116, %v105, 0
    %vm129 = vcmask 1043456
    %v131 = vsel %vm129, %v112, 0
    %v134 = vsel %vm129, %v113, 0
    %v137 = vsel %vm129, %v114, 0
    %v140 = vsel %vm129, %v115, 0
    %142 = vmatprep.subr.bf16.mxu0 %v134
    %143 = vmatpush1.bf16.msra.mxu0 %v131
    %144 = vmatprep.subr.bf16.mxu0 0
    %145 = vmatpush1.bf16.msra.mxu0 0
    %146 = vmatprep.subr.bf16.mxu0 0
    %147 = vmatpush1.bf16.msra.mxu0 0
    %148 = vmatprep.subr.bf16.mxu0 0
    %149 = vmatpush1.bf16.msra.mxu0 0
    %150 = vmatprep.subr.bf16.mxu0 0
    %151 = vmatpush1.bf16.msra.mxu0 0
    %152 = vmatprep.subr.bf16.mxu0 0
    %153 = vmatpush1.bf16.msra.mxu0 0
    %154 = vmatprep.subr.bf16.mxu0 0
    %155 = vmatpush1.bf16.msra.mxu0 0
    %156 = vmatprep.subr.bf16.mxu0 0
    %157 = vmatpush1.bf16.msra.mxu0 0
    %158 = vmatprep.subr.bf16.mxu0 0
    %159 = vmatpush1.bf16.msra.mxu0 0
    %160 = vmatprep.subr.bf16.mxu0 0
    %161 = vmatpush1.bf16.msra.mxu0 0
    %162 = vmatprep.subr.bf16.mxu0 0
    %163 = vmatpush1.bf16.msra.mxu0 0
    %164 = vmatprep.subr.bf16.mxu0 0
    %165 = vmatpush1.bf16.msra.mxu0 0
    %166 = vmatprep.subr.bf16.mxu0 0
    %167 = vmatpush1.bf16.msra.mxu0 0
    %168 = vmatprep.subr.bf16.mxu0 0
    %169 = vmatpush1.bf16.msra.mxu0 0
    %170 = vmatprep.subr.bf16.mxu0 0
    %171 = vmatpush1.bf16.msra.mxu0 0
    %172 = vmatprep.subr.bf16.mxu0 0
    %173 = vmatpush1.bf16.msra.mxu0 0
    %174 = vmatprep.mubr.bf16.mxu0 0
    %175 = vmatmul.mubr.bf16.gmra.mrb[0].mxu0 %v118
    %v176 = vpop.f32.mrb[0].mxu0
    %v177 = vadd.f32 %v69, %v176
    %v178 = vpop.f32.mrb[0].mxu0
    %v179 = vadd.f32 %v73, %v178
    %v180 = vpop.f32.mrb[0].mxu0
    %v181 = vadd.f32 %v69, %v180
    %v182 = vpop.f32.mrb[0].mxu0
    %v183 = vadd.f32 %v73, %v182
    %184 = vmatprep.mubr.bf16.mxu0 0
    %185 = vmatmul.mubr.bf16.gmra.mrb[0].mxu0 %v121
    %v186 = vpop.f32.mrb[0].mxu0
    %v187 = vadd.f32 %v69, %v186
    %v188 = vpop.f32.mrb[0].mxu0
    %v189 = vadd.f32 %v73, %v188
    %v190 = vpop.f32.mrb[0].mxu0
    %v191 = vadd.f32 %v69, %v190
    %v192 = vpop.f32.mrb[0].mxu0
    %v193 = vadd.f32 %v73, %v192
    %194 = vmatprep.mubr.bf16.mxu0 0
    %195 = vmatmul.mubr.bf16.gmra.mrb[0].mxu0 %v124
    %v196 = vpop.f32.mrb[0].mxu0
    %v197 = vadd.f32 %v69, %v196
    %v198 = vpop.f32.mrb[0].mxu0
    %v199 = vadd.f32 %v73, %v198
    %v200 = vpop.f32.mrb[0].mxu0
    %v201 = vadd.f32 %v69, %v200
    %v202 = vpop.f32.mrb[0].mxu0
    %v203 = vadd.f32 %v73, %v202
    %204 = vmatprep.mubr.bf16.mxu0 0
    %205 = vmatmul.mubr.bf16.gmra.mrb[0].mxu0 %v127
    %v206 = vpop.f32.mrb[0].mxu0
    %v207 = vadd.f32 %v69, %v206
    %v208 = vpop.f32.mrb[0].mxu0
    %v209 = vadd.f32 %v73, %v208
    %v210 = vpop.f32.mrb[0].mxu0
    %v211 = vadd.f32 %v69, %v210
    %v212 = vpop.f32.mrb[0].mxu0
    %v213 = vadd.f32 %v73, %v212
    %214 = vdwg.mxu0
    %215 = vmatprep.subr.bf16.mxu0 %v140
    %216 = vmatpush1.bf16.msra.mxu0 %v137
    %217 = vmatprep.subr.bf16.mxu0 0
    %218 = vmatpush1.bf16.msra.mxu0 0
    %219 = vmatprep.subr.bf16.mxu0 0
    %220 = vmatpush1.bf16.msra.mxu0 0
    %221 = vmatprep.subr.bf16.mxu0 0
    %222 = vmatpush1.bf16.msra.mxu0 0
    %223 = vmatprep.subr.bf16.mxu0 0
    %224 = vmatpush1.bf16.msra.mxu0 0
    %225 = vmatprep.subr.bf16.mxu0 0
    %226 = vmatpush1.bf16.msra.mxu0 0
    %227 = vmatprep.subr.bf16.mxu0 0
    %228 = vmatpush1.bf16.msra.mxu0 0
    %229 = vmatprep.subr.bf16.mxu0 0
    %230 = vmatpush1.bf16.msra.mxu0 0
    %231 = vmatprep.subr.bf16.mxu0 0
    %232 = vmatpush1.bf16.msra.mxu0 0
    %233 = vmatprep.subr.bf16.mxu0 0
    %234 = vmatpush1.bf16.msra.mxu0 0
    %235 = vmatprep.subr.bf16.mxu0 0
    %236 = vmatpush1.bf16.msra.mxu0 0
    %237 = vmatprep.subr.bf16.mxu0 0
    %238 = vmatpush1.bf16.msra.mxu0 0
    %239 = vmatprep.subr.bf16.mxu0 0
    %240 = vmatpush1.bf16.msra.mxu0 0
    %241 = vmatprep.subr.bf16.mxu0 0
    %242 = vmatpush1.bf16.msra.mxu0 0
    %243 = vmatprep.subr.bf16.mxu0 0
    %244 = vmatpush1.bf16.msra.mxu0 0
    %245 = vmatprep.subr.bf16.mxu0 0
    %246 = vmatpush1.bf16.msra.mxu0 0
    %247 = vmatprep.mubr.bf16.mxu0 0
    %248 = vmatmul.mubr.bf16.gmra.mrb[0].mxu0 %v118
    %v249 = vpop.f32.mrb[0].mxu0
    %v250 = vadd.f32 %v77, %v249
    %v251 = vpop.f32.mrb[0].mxu0
    %v252 = vadd.f32 %v81, %v251
    %v253 = vpop.f32.mrb[0].mxu0
    %v254 = vadd.f32 %v77, %v253
    %v255 = vpop.f32.mrb[0].mxu0
    %v256 = vadd.f32 %v81, %v255
    %257 = vmatprep.mubr.bf16.mxu0 0
    %258 = vmatmul.mubr.bf16.gmra.mrb[0].mxu0 %v121
    %v259 = vpop.f32.mrb[0].mxu0
    %v260 = vadd.f32 %v77, %v259
    %v261 = vpop.f32.mrb[0].mxu0
    %v262 = vadd.f32 %v81, %v261
    %v263 = vpop.f32.mrb[0].mxu0
    %v264 = vadd.f32 %v77, %v263
    %v265 = vpop.f32.mrb[0].mxu0
    %v266 = vadd.f32 %v81, %v265
    %267 = vmatprep.mubr.bf16.mxu0 0
    %268 = vmatmul.mubr.bf16.gmra.mrb[0].mxu0 %v124
    %v269 = vpop.f32.mrb[0].mxu0
    %v270 = vadd.f32 %v77, %v269
    %v271 = vpop.f32.mrb[0].mxu0
    %v272 = vadd.f32 %v81, %v271
    %v273 = vpop.f32.mrb[0].mxu0
    %v274 = vadd.f32 %v77, %v273
    %v275 = vpop.f32.mrb[0].mxu0
    %v276 = vadd.f32 %v81, %v275
    %277 = vmatprep.mubr.bf16.mxu0 0
    %278 = vmatmul.mubr.bf16.gmra.mrb[0].mxu0 %v127
    %v279 = vpop.f32.mrb[0].mxu0
    %v280 = vadd.f32 %v77, %v279
    %v281 = vpop.f32.mrb[0].mxu0
    %v282 = vadd.f32 %v81, %v281
    %v283 = vpop.f32.mrb[0].mxu0
    %v284 = vadd.f32 %v77, %v283
    %v285 = vpop.f32.mrb[0].mxu0
    %v286 = vadd.f32 %v81, %v285
    %287 = vdwg.mxu0
    %288 = vst [vmem:[#allocation2] sm:$0xff] %v177
    %289 = vst [vmem:[#allocation2 + $0x8] sm:$0xff] %v179
    %290 = vst [vmem:[#allocation2 + $0x10] sm:$0xff] %v250
    %291 = vst [vmem:[#allocation2 + $0x18] sm:$0xff] %v252
    %292 = vst [vmem:[#allocation2 + $0x20] sm:$0xff] %v181
    %293 = vst [vmem:[#allocation2 + $0x28] sm:$0xff] %v183
    %294 = vst [vmem:[#allocation2 + $0x30] sm:$0xff] %v254
    %295 = vst [vmem:[#allocation2 + $0x38] sm:$0xff] %v256
    %296 = vst [vmem:[#allocation2 + $0x40] sm:$0xff] %v187
    %297 = vst [vmem:[#allocation2 + $0x48] sm:$0xff] %v189
    %298 = vst [vmem:[#allocation2 + $0x50] sm:$0xff] %v260
    %299 = vst [vmem:[#allocation2 + $0x58] sm:$0xff] %v262
    %300 = vst [vmem:[#allocation2 + $0x60] sm:$0xff] %v191
    %301 = vst [vmem:[#allocation2 + $0x68] sm:$0xff] %v193
    %302 = vst [vmem:[#allocation2 + $0x70] sm:$0xff] %v264
    %303 = vst [vmem:[#allocation2 + $0x78] sm:$0xff] %v266
    %304 = vst [vmem:[#allocation2 + $0x80] sm:$0xff] %v197
    %305 = vst [vmem:[#allocation2 + $0x88] sm:$0xff] %v199
    %306 = vst [vmem:[#allocation2 + $0x90] sm:$0xff] %v270
    %307 = vst [vmem:[#allocation2 + $0x98] sm:$0xff] %v272
    %308 = vst [vmem:[#allocation2 + $0xa0] sm:$0xff] %v201
    %309 = vst [vmem:[#allocation2 + $0xa8] sm:$0xff] %v203
    %310 = vst [vmem:[#allocation2 + $0xb0] sm:$0xff] %v274
    %311 = vst [vmem:[#allocation2 + $0xb8] sm:$0xff] %v276
    %312 = vst [vmem:[#allocation2 + $0xc0] sm:$0xff] %v207
    %313 = vst [vmem:[#allocation2 + $0xc8] sm:$0xff] %v209
    %314 = vst [vmem:[#allocation2 + $0xd0] sm:$0xff] %v280
    %315 = vst [vmem:[#allocation2 + $0xd8] sm:$0xff] %v282
    %316 = vst [vmem:[#allocation2 + $0xe0] sm:$0xff] %v211
    %317 = vst [vmem:[#allocation2 + $0xe8] sm:$0xff] %v213
    %318 = vst [vmem:[#allocation2 + $0xf0] sm:$0xff] %v284
    %319 = vst [vmem:[#allocation2 + $0xf8] sm:$0xff] %v286
    %v320 = vld [vmem:[#allocation2] sm:$0xff]
    %v321 = vld [vmem:[#allocation2 + $0x8] sm:$0xff]
    %v322 = vld [vmem:[#allocation2 + $0x10] sm:$0xff]
    %v323 = vld [vmem:[#allocation2 + $0x18] sm:$0xff]
    %v324 = vld [vmem:[#allocation4] sm:$0xff]
    %v325 = vld [vmem:[#allocation4 + $0x8] sm:$0xff]
    %v326 = vld [vmem:[#allocation4 + $0x10] sm:$0xff]
    %v327 = vld [vmem:[#allocation4 + $0x18] sm:$0xff]
    %v328 = vld [vmem:[#allocation4 + $0x20] sm:$0xff]
    %v329 = vld [vmem:[#allocation4 + $0x28] sm:$0xff]
    %v330 = vld [vmem:[#allocation4 + $0x30] sm:$0xff]
    %v331 = vld [vmem:[#allocation4 + $0x38] sm:$0xff]
    %v332 = vld [vmem:[#allocation4 + $0x40] sm:$0xff]
    %v333 = vld [vmem:[#allocation4 + $0x48] sm:$0xff]
    %v334 = vld [vmem:[#allocation4 + $0x50] sm:$0xff]
    %v335 = vld [vmem:[#allocation4 + $0x58] sm:$0xff]
    %v336 = vld [vmem:[#allocation4 + $0x60] sm:$0xff]
    %v337 = vld [vmem:[#allocation4 + $0x68] sm:$0xff]
    %v338 = vld [vmem:[#allocation4 + $0x70] sm:$0xff]
    %v339 = vld [vmem:[#allocation4 + $0x78] sm:$0xff]
    %v340 = vld [vmem:[#allocation4 + $0x80] sm:$0xff]
    %v341 = vld [vmem:[#allocation4 + $0x88] sm:$0xff]
    %v342 = vld [vmem:[#allocation4 + $0x90] sm:$0xff]
    %v343 = vld [vmem:[#allocation4 + $0x98] sm:$0xff]
    %v344 = vld [vmem:[#allocation4 + $0xa0] sm:$0xff]
    %v345 = vld [vmem:[#allocation4 + $0xa8] sm:$0xff]
    %v346 = vld [vmem:[#allocation4 + $0xb0] sm:$0xff]
    %v347 = vld [vmem:[#allocation4 + $0xb8] sm:$0xff]
    %v348 = vld [vmem:[#allocation4 + $0xc0] sm:$0xff]
    %v349 = vld [vmem:[#allocation4 + $0xc8] sm:$0xff]
    %v350 = vld [vmem:[#allocation4 + $0xd0] sm:$0xff]
    %v351 = vld [vmem:[#allocation4 + $0xd8] sm:$0xff]
    %v352 = vld [vmem:[#allocation4 + $0xe0] sm:$0xff]
    %v353 = vld [vmem:[#allocation4 + $0xe8] sm:$0xff]
    %v354 = vld [vmem:[#allocation4 + $0xf0] sm:$0xff]
    %v355 = vld [vmem:[#allocation4 + $0xf8] sm:$0xff]
    %v388 = vunpack.c.l.b16 %v324
    %v389 = vunpack.c.h.b16 %v324
    %v390 = vunpack.c.l.b16 %v325
    %v391 = vunpack.c.h.b16 %v325
    %v392 = vunpack.c.l.b16 %v326
    %v393 = vunpack.c.h.b16 %v326
    %v394 = vunpack.c.l.b16 %v327
    %v395 = vunpack.c.h.b16 %v327
    %v396 = vunpack.c.l.b16 %v328
    %v397 = vunpack.c.h.b16 %v328
    %v398 = vunpack.c.l.b16 %v329
    %v399 = vunpack.c.h.b16 %v329
    %v400 = vunpack.c.l.b16 %v330
    %v401 = vunpack.c.h.b16 %v330
    %v402 = vunpack.c.l.b16 %v331
    %v403 = vunpack.c.h.b16 %v331
    %v404 = vunpack.c.l.b16 %v332
    %v405 = vunpack.c.h.b16 %v332
    %v406 = vunpack.c.l.b16 %v333
    %v407 = vunpack.c.h.b16 %v333
    %v408 = vunpack.c.l.b16 %v334
    %v409 = vunpack.c.h.b16 %v334
    %v410 = vunpack.c.l.b16 %v335
    %v411 = vunpack.c.h.b16 %v335
    %v412 = vunpack.c.l.b16 %v336
    %v413 = vunpack.c.h.b16 %v336
    %v414 = vunpack.c.l.b16 %v337
    %v415 = vunpack.c.h.b16 %v337
    %v416 = vunpack.c.l.b16 %v338
    %v417 = vunpack.c.h.b16 %v338
    %v418 = vunpack.c.l.b16 %v339
    %v419 = vunpack.c.h.b16 %v339
    %v420 = vunpack.c.l.b16 %v340
    %v421 = vunpack.c.h.b16 %v340
    %v422 = vunpack.c.l.b16 %v341
    %v423 = vunpack.c.h.b16 %v341
    %v424 = vunpack.c.l.b16 %v342
    %v425 = vunpack.c.h.b16 %v342
    %v426 = vunpack.c.l.b16 %v343
    %v427 = vunpack.c.h.b16 %v343
    %v428 = vunpack.c.l.b16 %v344
    %v429 = vunpack.c.h.b16 %v344
    %v430 = vunpack.c.l.b16 %v345
    %v431 = vunpack.c.h.b16 %v345
    %v432 = vunpack.c.l.b16 %v346
    %v433 = vunpack.c.h.b16 %v346
    %v434 = vunpack.c.l.b16 %v347
    %v435 = vunpack.c.h.b16 %v347
    %v436 = vunpack.c.l.b16 %v348
    %v437 = vunpack.c.h.b16 %v348
    %v438 = vunpack.c.l.b16 %v349
    %v439 = vunpack.c.h.b16 %v349
    %v440 = vunpack.c.l.b16 %v350
    %v441 = vunpack.c.h.b16 %v350
    %v442 = vunpack.c.l.b16 %v351
    %v443 = vunpack.c.h.b16 %v351
    %v444 = vunpack.c.l.b16 %v352
    %v445 = vunpack.c.h.b16 %v352
    %v446 = vunpack.c.l.b16 %v353
    %v447 = vunpack.c.h.b16 %v353
    %v448 = vunpack.c.l.b16 %v354
    %v449 = vunpack.c.h.b16 %v354
    %v450 = vunpack.c.l.b16 %v355
    %v451 = vunpack.c.h.b16 %v355
    %v452 = vpack.c.b16 %v392, %v388
    %v453 = vpack.c.b16 %v393, %v389
    %v454 = vpack.c.b16 %v394, %v390
    %v455 = vpack.c.b16 %v395, %v391
    %v456 = vpack.c.b16 %v400, %v396
    %v457 = vpack.c.b16 %v401, %v397
    %v458 = vpack.c.b16 %v402, %v398
    %v459 = vpack.c.b16 %v403, %v399
    %v460 = vpack.c.b16 %v408, %v404
    %v461 = vpack.c.b16 %v409, %v405
    %v462 = vpack.c.b16 %v410, %v406
    %v463 = vpack.c.b16 %v411, %v407
    %v464 = vpack.c.b16 %v416, %v412
    %v465 = vpack.c.b16 %v417, %v413
    %v466 = vpack.c.b16 %v418, %v414
    %v467 = vpack.c.b16 %v419, %v415
    %v468 = vpack.c.b16 %v424, %v420
    %v469 = vpack.c.b16 %v425, %v421
    %v470 = vpack.c.b16 %v426, %v422
    %v471 = vpack.c.b16 %v427, %v423
    %v472 = vpack.c.b16 %v432, %v428
    %v473 = vpack.c.b16 %v433, %v429
    %v474 = vpack.c.b16 %v434, %v430
    %v475 = vpack.c.b16 %v435, %v431
    %v476 = vpack.c.b16 %v440, %v436
    %v477 = vpack.c.b16 %v441, %v437
    %v478 = vpack.c.b16 %v442, %v438
    %v479 = vpack.c.b16 %v443, %v439
    %v480 = vpack.c.b16 %v448, %v444
    %v481 = vpack.c.b16 %v449, %v445
    %v482 = vpack.c.b16 %v450, %v446
    %v483 = vpack.c.b16 %v451, %v447
    %516 = vmatprep.subr.bf16.mxu0 %v453
    %517 = vmatpush1.bf16.msra.mxu0 %v452
    %518 = vmatprep.subr.bf16.mxu0 %v457
    %519 = vmatpush1.bf16.msra.mxu0 %v456
    %520 = vmatprep.subr.bf16.mxu0 %v461
    %521 = vmatpush1.bf16.msra.mxu0 %v460
    %522 = vmatprep.subr.bf16.mxu0 %v465
    %523 = vmatpush1.bf16.msra.mxu0 %v464
    %524 = vmatprep.subr.bf16.mxu0 %v469
    %525 = vmatpush1.bf16.msra.mxu0 %v468
    %526 = vmatprep.subr.bf16.mxu0 %v473
    %527 = vmatpush1.bf16.msra.mxu0 %v472
    %528 = vmatprep.subr.bf16.mxu0 %v477
    %529 = vmatpush1.bf16.msra.mxu0 %v476
    %530 = vmatprep.subr.bf16.mxu0 %v481
    %531 = vmatpush1.bf16.msra.mxu0 %v480
    %532 = vmatprep.subr.bf16.mxu0 0
    %533 = vmatpush1.bf16.msra.mxu0 0
    %534 = vmatprep.subr.bf16.mxu0 0
    %535 = vmatpush1.bf16.msra.mxu0 0
    %536 = vmatprep.subr.bf16.mxu0 0
    %537 = vmatpush1.bf16.msra.mxu0 0
    %538 = vmatprep.subr.bf16.mxu0 0
    %539 = vmatpush1.bf16.msra.mxu0 0
    %540 = vmatprep.subr.bf16.mxu0 0
    %541 = vmatpush1.bf16.msra.mxu0 0
    %542 = vmatprep.subr.bf16.mxu0 0
    %543 = vmatpush1.bf16.msra.mxu0 0
    %544 = vmatprep.subr.bf16.mxu0 0
    %545 = vmatpush1.bf16.msra.mxu0 0
    %546 = vmatprep.subr.bf16.mxu0 0
    %547 = vmatpush1.bf16.msra.mxu0 0
    %548 = vmatprep.mubr.bf16.mxu0 0
    %549 = vmatmul.mubr.bf16.gmra.mrb[0].mxu0 0
    %v550 = vpop.f32.mrb[0].mxu0
    %v551 = vadd.f32 0.0, %v550
    %v552 = vpop.f32.mrb[0].mxu0
    %v553 = vadd.f32 0.0, %v552
    %v554 = vpop.f32.mrb[0].mxu0
    %v555 = vpop.f32.mrb[0].mxu0
    %556 = vdwg.mxu0
    %557 = vmatprep.subr.bf16.mxu0 %v455
    %558 = vmatpush1.bf16.msra.mxu0 %v454
    %559 = vmatprep.subr.bf16.mxu0 %v459
    %560 = vmatpush1.bf16.msra.mxu0 %v458
    %561 = vmatprep.subr.bf16.mxu0 %v463
    %562 = vmatpush1.bf16.msra.mxu0 %v462
    %563 = vmatprep.subr.bf16.mxu0 %v467
    %564 = vmatpush1.bf16.msra.mxu0 %v466
    %565 = vmatprep.subr.bf16.mxu0 %v471
    %566 = vmatpush1.bf16.msra.mxu0 %v470
    %567 = vmatprep.subr.bf16.mxu0 %v475
    %568 = vmatpush1.bf16.msra.mxu0 %v474
    %569 = vmatprep.subr.bf16.mxu0 %v479
    %570 = vmatpush1.bf16.msra.mxu0 %v478
    %571 = vmatprep.subr.bf16.mxu0 %v483
    %572 = vmatpush1.bf16.msra.mxu0 %v482
    %573 = vmatprep.subr.bf16.mxu0 0
    %574 = vmatpush1.bf16.msra.mxu0 0
    %575 = vmatprep.subr.bf16.mxu0 0
    %576 = vmatpush1.bf16.msra.mxu0 0
    %577 = vmatprep.subr.bf16.mxu0 0
    %578 = vmatpush1.bf16.msra.mxu0 0
    %579 = vmatprep.subr.bf16.mxu0 0
    %580 = vmatpush1.bf16.msra.mxu0 0
    %581 = vmatprep.subr.bf16.mxu0 0
    %582 = vmatpush1.bf16.msra.mxu0 0
    %583 = vmatprep.subr.bf16.mxu0 0
    %584 = vmatpush1.bf16.msra.mxu0 0
    %585 = vmatprep.subr.bf16.mxu0 0
    %586 = vmatpush1.bf16.msra.mxu0 0
    %587 = vmatprep.subr.bf16.mxu0 0
    %588 = vmatpush1.bf16.msra.mxu0 0
    %589 = vmatprep.mubr.bf16.mxu0 0
    %590 = vmatmul.mubr.bf16.gmra.mrb[0].mxu0 0
    %v591 = vpop.f32.mrb[0].mxu0
    %v592 = vadd.f32 0.0, %v591
    %v593 = vpop.f32.mrb[0].mxu0
    %v594 = vadd.f32 0.0, %v593
    %v595 = vpop.f32.mrb[0].mxu0
    %v596 = vpop.f32.mrb[0].mxu0
    %597 = vdwg.mxu0
    %v598 = vadd.f32 %v320, %v551
    %v599 = vadd.f32 %v321, %v553
    %v600 = vadd.f32 %v322, %v592
    %v601 = vadd.f32 %v323, %v594
    %v602 = vxor.u32 %v598, 2147483648
    %v603 = vxor.u32 %v599, 2147483648
    %v604 = vxor.u32 %v600, 2147483648
    %v605 = vmul.f32 %v602, 1.442695
    %v606 = vpow.pop %v605
    %v607 = vmul.f32 %v603, 1.442695
    %v608 = vpow.pop %v607
    %v609 = vmul.f32 %v604, 1.442695
    %v610 = vpow.pop %v609
    %v611 = vadd.f32 %v606, 1.0
    %v612 = vadd.f32 %v608, 1.0
    %v613 = vadd.f32 %v610, 1.0
    %v614 = vrcp.pop %v611
    %v615 = vmul.f32 1.0, %v614
    %v616 = vrcp.pop %v612
    %v617 = vmul.f32 1.0, %v616
    %v618 = vrcp.pop %v613
    %v619 = vmul.f32 1.0, %v618
    %v620 = vtanh.pop %v601
    %v621 = vmul.f32 %v617, 0.0
    %v622 = vmul.f32 %v615, %v620
    %v623 = vadd.f32 %v621, %v622
    %v624 = vtanh.pop %v623
    %v625 = vmul.f32 %v619, %v624
    %v626 = vld [vmem:[#allocation2 + $0x20] sm:$0xff]
    %v627 = vld [vmem:[#allocation2 + $0x28] sm:$0xff]
    %v628 = vld [vmem:[#allocation2 + $0x30] sm:$0xff]
    %v629 = vld [vmem:[#allocation2 + $0x38] sm:$0xff]
    %v630 = vpack.c.bf16 %v625, %v625
    %631 = vmatprep.subr.bf16.mxu0 %v453
    %632 = vmatpush1.bf16.msra.mxu0 %v452
    %633 = vmatprep.subr.bf16.mxu0 %v457
    %634 = vmatpush1.bf16.msra.mxu0 %v456
    %635 = vmatprep.subr.bf16.mxu0 %v461
    %636 = vmatpush1.bf16.msra.mxu0 %v460
    %637 = vmatprep.subr.bf16.mxu0 %v465
    %638 = vmatpush1.bf16.msra.mxu0 %v464
    %639 = vmatprep.subr.bf16.mxu0 %v469
    %640 = vmatpush1.bf16.msra.mxu0 %v468
    %641 = vmatprep.subr.bf16.mxu0 %v473
    %642 = vmatpush1.bf16.msra.mxu0 %v472
    %643 = vmatprep.subr.bf16.mxu0 %v477
    %644 = vmatpush1.bf16.msra.mxu0 %v476
    %645 = vmatprep.subr.bf16.mxu0 %v481
    %646 = vmatpush1.bf16.msra.mxu0 %v480
    %647 = vmatprep.subr.bf16.mxu0 0
    %648 = vmatpush1.bf16.msra.mxu0 0
    %649 = vmatprep.subr.bf16.mxu0 0
    %650 = vmatpush1.bf16.msra.mxu0 0
    %651 = vmatprep.subr.bf16.mxu0 0
    %652 = vmatpush1.bf16.msra.mxu0 0
    %653 = vmatprep.subr.bf16.mxu0 0
    %654 = vmatpush1.bf16.msra.mxu0 0
    %655 = vmatprep.subr.bf16.mxu0 0
    %656 = vmatpush1.bf16.msra.mxu0 0
    %657 = vmatprep.subr.bf16.mxu0 0
    %658 = vmatpush1.bf16.msra.mxu0 0
    %659 = vmatprep.subr.bf16.mxu0 0
    %660 = vmatpush1.bf16.msra.mxu0 0
    %661 = vmatprep.subr.bf16.mxu0 0
    %662 = vmatpush1.bf16.msra.mxu0 0
    %663 = vmatprep.mubr.bf16.mxu0 0
    %664 = vmatmul.mubr.bf16.gmra.mrb[0].mxu0 %v630
    %v665 = vpop.f32.mrb[0].mxu0
    %v666 = vadd.f32 0.0, %v665
    %v667 = vpop.f32.mrb[0].mxu0
    %v668 = vadd.f32 0.0, %v667
    %v669 = vpop.f32.mrb[0].mxu0
    %v670 = vpop.f32.mrb[0].mxu0
    %671 = vdwg.mxu0
    %672 = vmatprep.subr.bf16.mxu0 %v455
    %673 = vmatpush1.bf16.msra.mxu0 %v454
    %674 = vmatprep.subr.bf16.mxu0 %v459
    %675 = vmatpush1.bf16.msra.mxu0 %v458
    %676 = vmatprep.subr.bf16.mxu0 %v463
    %677 = vmatpush1.bf16.msra.mxu0 %v462
    %678 = vmatprep.subr.bf16.mxu0 %v467
    %679 = vmatpush1.bf16.msra.mxu0 %v466
    %680 = vmatprep.subr.bf16.mxu0 %v471
    %681 = vmatpush1.bf16.msra.mxu0 %v470
    %682 = vmatprep.subr.bf16.mxu0 %v475
    %683 = vmatpush1.bf16.msra.mxu0 %v474
    %684 = vmatprep.subr.bf16.mxu0 %v479
    %685 = vmatpush1.bf16.msra.mxu0 %v478
    %686 = vmatprep.subr.bf16.mxu0 %v483
    %687 = vmatpush1.bf16.msra.mxu0 %v482
    %688 = vmatprep.subr.bf16.mxu0 0
    %689 = vmatpush1.bf16.msra.mxu0 0
    %690 = vmatprep.subr.bf16.mxu0 0
    %691 = vmatpush1.bf16.msra.mxu0 0
    %692 = vmatprep.subr.bf16.mxu0 0
    %693 = vmatpush1.bf16.msra.mxu0 0
    %694 = vmatprep.subr.bf16.mxu0 0
    %695 = vmatpush1.bf16.msra.mxu0 0
    %696 = vmatprep.subr.bf16.mxu0 0
    %697 = vmatpush1.bf16.msra.mxu0 0
    %698 = vmatprep.subr.bf16.mxu0 0
    %699 = vmatpush1.bf16.msra.mxu0 0
    %700 = vmatprep.subr.bf16.mxu0 0
    %701 = vmatpush1.bf16.msra.mxu0 0
    %702 = vmatprep.subr.bf16.mxu0 0
    %703 = vmatpush1.bf16.msra.mxu0 0
    %704 = vmatprep.mubr.bf16.mxu0 0
    %705 = vmatmul.mubr.bf16.gmra.mrb[0].mxu0 %v630
    %v706 = vpop.f32.mrb[0].mxu0
    %v707 = vadd.f32 0.0, %v706
    %v708 = vpop.f32.mrb[0].mxu0
    %v709 = vadd.f32 0.0, %v708
    %v710 = vpop.f32.mrb[0].mxu0
    %v711 = vpop.f32.mrb[0].mxu0
    %712 = vdwg.mxu0
    %v713 = vadd.f32 %v626, %v666
    %v714 = vadd.f32 %v627, %v668
    %v715 = vadd.f32 %v628, %v707
    %v716 = vadd.f32 %v629, %v709
    %v717 = vxor.u32 %v713, 2147483648
    %v718 = vxor.u32 %v714, 2147483648
    %v719 = vxor.u32 %v715, 2147483648
    %v720 = vmul.f32 %v717, 1.442695
    %v721 = vpow.pop %v720
    %v722 = vmul.f32 %v718, 1.442695
    %v723 = vpow.pop %v722
    %v724 = vmul.f32 %v719, 1.442695
    %v725 = vpow.pop %v724
    %v726 = vadd.f32 %v721, 1.0
    %v727 = vadd.f32 %v723, 1.0
    %v728 = vadd.f32 %v725, 1.0
    %v729 = vrcp.pop %v726
    %v730 = vmul.f32 1.0, %v729
    %v731 = vrcp.pop %v727
    %v732 = vmul.f32 1.0, %v731
    %v733 = vrcp.pop %v728
    %v734 = vmul.f32 1.0, %v733
    %v735 = vtanh.pop %v716
    %v736 = vmul.f32 %v732, %v623
    %v737 = vmul.f32 %v730, %v735
    %v738 = vadd.f32 %v736, %v737
    %v739 = vtanh.pop %v738
    %v740 = vmul.f32 %v734, %v739
    %v741 = vld [vmem:[#allocation2 + $0x40] sm:$0xff]
    %v742 = vld [vmem:[#allocation2 + $0x48] sm:$0xff]
    %v743 = vld [vmem:[#allocation2 + $0x50] sm:$0xff]
    %v744 = vld [vmem:[#allocation2 + $0x58] sm:$0xff]
    %v745 = vpack.c.bf16 %v740, %v740
    %746 = vmatprep.subr.bf16.mxu0 %v453
    %747 = vmatpush1.bf16.msra.mxu0 %v452
    %748 = vmatprep.subr.bf16.mxu0 %v457
    %749 = vmatpush1.bf16.msra.mxu0 %v456
    %750 = vmatprep.subr.bf16.mxu0 %v461
    %751 = vmatpush1.bf16.msra.mxu0 %v460
    %752 = vmatprep.subr.bf16.mxu0 %v465
    %753 = vmatpush1.bf16.msra.mxu0 %v464
    %754 = vmatprep.subr.bf16.mxu0 %v469
    %755 = vmatpush1.bf16.msra.mxu0 %v468
    %756 = vmatprep.subr.bf16.mxu0 %v473
    %757 = vmatpush1.bf16.msra.mxu0 %v472
    %758 = vmatprep.subr.bf16.mxu0 %v477
    %759 = vmatpush1.bf16.msra.mxu0 %v476
    %760 = vmatprep.subr.bf16.mxu0 %v481
    %761 = vmatpush1.bf16.msra.mxu0 %v480
    %762 = vmatprep.subr.bf16.mxu0 0
    %763 = vmatpush1.bf16.msra.mxu0 0
    %764 = vmatprep.subr.bf16.mxu0 0
    %765 = vmatpush1.bf16.msra.mxu0 0
    %766 = vmatprep.subr.bf16.mxu0 0
    %767 = vmatpush1.bf16.msra.mxu0 0
    %768 = vmatprep.subr.bf16.mxu0 0
    %769 = vmatpush1.bf16.msra.mxu0 0
    %770 = vmatprep.subr.bf16.mxu0 0
    %771 = vmatpush1.bf16.msra.mxu0 0
    %772 = vmatprep.subr.bf16.mxu0 0
    %773 = vmatpush1.bf16.msra.mxu0 0
    %774 = vmatprep.subr.bf16.mxu0 0
    %775 = vmatpush1.bf16.msra.mxu0 0
    %776 = vmatprep.subr.bf16.mxu0 0
    %777 = vmatpush1.bf16.msra.mxu0 0
    %778 = vmatprep.mubr.bf16.mxu0 0
    %779 = vmatmul.mubr.bf16.gmra.mrb[0].mxu0 %v745
    %v780 = vpop.f32.mrb[0].mxu0
    %v781 = vadd.f32 0.0, %v780
    %v782 = vpop.f32.mrb[0].mxu0
    %v783 = vadd.f32 0.0, %v782
    %v784 = vpop.f32.mrb[0].mxu0
    %v785 = vpop.f32.mrb[0].mxu0
    %786 = vdwg.mxu0
    %787 = vmatprep.subr.bf16.mxu0 %v455
    %788 = vmatpush1.bf16.msra.mxu0 %v454
    %789 = vmatprep.subr.bf16.mxu0 %v459
    %790 = vmatpush1.bf16.msra.mxu0 %v458
    %791 = vmatprep.subr.bf16.mxu0 %v463
    %792 = vmatpush1.bf16.msra.mxu0 %v462
    %793 = vmatprep.subr.bf16.mxu0 %v467
    %794 = vmatpush1.bf16.msra.mxu0 %v466
    %795 = vmatprep.subr.bf16.mxu0 %v471
    %796 = vmatpush1.bf16.msra.mxu0 %v470
    %797 = vmatprep.subr.bf16.mxu0 %v475
    %798 = vmatpush1.bf16.msra.mxu0 %v474
    %799 = vmatprep.subr.bf16.mxu0 %v479
    %800 = vmatpush1.bf16.msra.mxu0 %v478
    %801 = vmatprep.subr.bf16.mxu0 %v483
    %802 = vmatpush1.bf16.msra.mxu0 %v482
    %803 = vmatprep.subr.bf16.mxu0 0
    %804 = vmatpush1.bf16.msra.mxu0 0
    %805 = vmatprep.subr.bf16.mxu0 0
    %806 = vmatpush1.bf16.msra.mxu0 0
    %807 = vmatprep.subr.bf16.mxu0 0
    %808 = vmatpush1.bf16.msra.mxu0 0
    %809 = vmatprep.subr.bf16.mxu0 0
    %810 = vmatpush1.bf16.msra.mxu0 0
    %811 = vmatprep.subr.bf16.mxu0 0
    %812 = vmatpush1.bf16.msra.mxu0 0
    %813 = vmatprep.subr.bf16.mxu0 0
    %814 = vmatpush1.bf16.msra.mxu0 0
    %815 = vmatprep.subr.bf16.mxu0 0
    %816 = vmatpush1.bf16.msra.mxu0 0
    %817 = vmatprep.subr.bf16.mxu0 0
    %818 = vmatpush1.bf16.msra.mxu0 0
    %819 = vmatprep.mubr.bf16.mxu0 0
    %820 = vmatmul.mubr.bf16.gmra.mrb[0].mxu0 %v745
    %v821 = vpop.f32.mrb[0].mxu0
    %v822 = vadd.f32 0.0, %v821
    %v823 = vpop.f32.mrb[0].mxu0
    %v824 = vadd.f32 0.0, %v823
    %v825 = vpop.f32.mrb[0].mxu0
    %v826 = vpop.f32.mrb[0].mxu0
    %827 = vdwg.mxu0
    %v828 = vadd.f32 %v741, %v781
    %v829 = vadd.f32 %v742, %v783
    %v830 = vadd.f32 %v743, %v822
    %v831 = vadd.f32 %v744, %v824
    %v832 = vxor.u32 %v828, 2147483648
    %v833 = vxor.u32 %v829, 2147483648
    %v834 = vxor.u32 %v830, 2147483648
    %v835 = vmul.f32 %v832, 1.442695
    %v836 = vpow.pop %v835
    %v837 = vmul.f32 %v833, 1.442695
    %v838 = vpow.pop %v837
    %v839 = vmul.f32 %v834, 1.442695
    %v840 = vpow.pop %v839
    %v841 = vadd.f32 %v836, 1.0
    %v842 = vadd.f32 %v838, 1.0
    %v843 = vadd.f32 %v840, 1.0
    %v844 = vrcp.pop %v841
    %v845 = vmul.f32 1.0, %v844
    %v846 = vrcp.pop %v842
    %v847 = vmul.f32 1.0, %v846
    %v848 = vrcp.pop %v843
    %v849 = vmul.f32 1.0, %v848
    %v850 = vtanh.pop %v831
    %v851 = vmul.f32 %v847, %v738
    %v852 = vmul.f32 %v845, %v850
    %v853 = vadd.f32 %v851, %v852
    %v854 = vtanh.pop %v853
    %v855 = vmul.f32 %v849, %v854
    %v856 = vld [vmem:[#allocation2 + $0x60] sm:$0xff]
    %v857 = vld [vmem:[#allocation2 + $0x68] sm:$0xff]
    %v858 = vld [vmem:[#allocation2 + $0x70] sm:$0xff]
    %v859 = vld [vmem:[#allocation2 + $0x78] sm:$0xff]
    %v860 = vpack.c.bf16 %v855, %v855
    %861 = vmatprep.subr.bf16.mxu0 %v453
    %862 = vmatpush1.bf16.msra.mxu0 %v452
    %863 = vmatprep.subr.bf16.mxu0 %v457
    %864 = vmatpush1.bf16.msra.mxu0 %v456
    %865 = vmatprep.subr.bf16.mxu0 %v461
    %866 = vmatpush1.bf16.msra.mxu0 %v460
    %867 = vmatprep.subr.bf16.mxu0 %v465
    %868 = vmatpush1.bf16.msra.mxu0 %v464
    %869 = vmatprep.subr.bf16.mxu0 %v469
    %870 = vmatpush1.bf16.msra.mxu0 %v468
    %871 = vmatprep.subr.bf16.mxu0 %v473
    %872 = vmatpush1.bf16.msra.mxu0 %v472
    %873 = vmatprep.subr.bf16.mxu0 %v477
    %874 = vmatpush1.bf16.msra.mxu0 %v476
    %875 = vmatprep.subr.bf16.mxu0 %v481
    %876 = vmatpush1.bf16.msra.mxu0 %v480
    %877 = vmatprep.subr.bf16.mxu0 0
    %878 = vmatpush1.bf16.msra.mxu0 0
    %879 = vmatprep.subr.bf16.mxu0 0
    %880 = vmatpush1.bf16.msra.mxu0 0
    %881 = vmatprep.subr.bf16.mxu0 0
    %882 = vmatpush1.bf16.msra.mxu0 0
    %883 = vmatprep.subr.bf16.mxu0 0
    %884 = vmatpush1.bf16.msra.mxu0 0
    %885 = vmatprep.subr.bf16.mxu0 0
    %886 = vmatpush1.bf16.msra.mxu0 0
    %887 = vmatprep.subr.bf16.mxu0 0
    %888 = vmatpush1.bf16.msra.mxu0 0
    %889 = vmatprep.subr.bf16.mxu0 0
    %890 = vmatpush1.bf16.msra.mxu0 0
    %891 = vmatprep.subr.bf16.mxu0 0
    %892 = vmatpush1.bf16.msra.mxu0 0
    %893 = vmatprep.mubr.bf16.mxu0 0
    %894 = vmatmul.mubr.bf16.gmra.mrb[0].mxu0 %v860
    %v895 = vpop.f32.mrb[0].mxu0
    %v896 = vadd.f32 0.0, %v895
    %v897 = vpop.f32.mrb[0].mxu0
    %v898 = vadd.f32 0.0, %v897
    %v899 = vpop.f32.mrb[0].mxu0
    %v900 = vpop.f32.mrb[0].mxu0
    %901 = vdwg.mxu0
    %902 = vmatprep.subr.bf16.mxu0 %v455
    %903 = vmatpush1.bf16.msra.mxu0 %v454
    %904 = vmatprep.subr.bf16.mxu0 %v459
    %905 = vmatpush1.bf16.msra.mxu0 %v458
    %906 = vmatprep.subr.bf16.mxu0 %v463
    %907 = vmatpush1.bf16.msra.mxu0 %v462
    %908 = vmatprep.subr.bf16.mxu0 %v467
    %909 = vmatpush1.bf16.msra.mxu0 %v466
    %910 = vmatprep.subr.bf16.mxu0 %v471
    %911 = vmatpush1.bf16.msra.mxu0 %v470
    %912 = vmatprep.subr.bf16.mxu0 %v475
    %913 = vmatpush1.bf16.msra.mxu0 %v474
    %914 = vmatprep.subr.bf16.mxu0 %v479
    %915 = vmatpush1.bf16.msra.mxu0 %v478
    %916 = vmatprep.subr.bf16.mxu0 %v483
    %917 = vmatpush1.bf16.msra.mxu0 %v482
    %918 = vmatprep.subr.bf16.mxu0 0
    %919 = vmatpush1.bf16.msra.mxu0 0
    %920 = vmatprep.subr.bf16.mxu0 0
    %921 = vmatpush1.bf16.msra.mxu0 0
    %922 = vmatprep.subr.bf16.mxu0 0
    %923 = vmatpush1.bf16.msra.mxu0 0
    %924 = vmatprep.subr.bf16.mxu0 0
    %925 = vmatpush1.bf16.msra.mxu0 0
    %926 = vmatprep.subr.bf16.mxu0 0
    %927 = vmatpush1.bf16.msra.mxu0 0
    %928 = vmatprep.subr.bf16.mxu0 0
    %929 = vmatpush1.bf16.msra.mxu0 0
    %930 = vmatprep.subr.bf16.mxu0 0
    %931 = vmatpush1.bf16.msra.mxu0 0
    %932 = vmatprep.subr.bf16.mxu0 0
    %933 = vmatpush1.bf16.msra.mxu0 0
    %934 = vmatprep.mubr.bf16.mxu0 0
    %935 = vmatmul.mubr.bf16.gmra.mrb[0].mxu0 %v860
    %v936 = vpop.f32.mrb[0].mxu0
    %v937 = vadd.f32 0.0, %v936
    %v938 = vpop.f32.mrb[0].mxu0
    %v939 = vadd.f32 0.0, %v938
    %v940 = vpop.f32.mrb[0].mxu0
    %v941 = vpop.f32.mrb[0].mxu0
    %942 = vdwg.mxu0
    %v943 = vadd.f32 %v856, %v896
    %v944 = vadd.f32 %v857, %v898
    %v945 = vadd.f32 %v858, %v937
    %v946 = vadd.f32 %v859, %v939
    %v947 = vxor.u32 %v943, 2147483648
    %v948 = vxor.u32 %v944, 2147483648
    %v949 = vxor.u32 %v945, 2147483648
    %v950 = vmul.f32 %v947, 1.442695
    %v951 = vpow.pop %v950
    %v952 = vmul.f32 %v948, 1.442695
    %v953 = vpow.pop %v952
    %v954 = vmul.f32 %v949, 1.442695
    %v955 = vpow.pop %v954
    %v956 = vadd.f32 %v951, 1.0
    %v957 = vadd.f32 %v953, 1.0
    %v958 = vadd.f32 %v955, 1.0
    %v959 = vrcp.pop %v956
    %v960 = vmul.f32 1.0, %v959
    %v961 = vrcp.pop %v957
    %v962 = vmul.f32 1.0, %v961
    %v963 = vrcp.pop %v958
    %v964 = vmul.f32 1.0, %v963
    %v965 = vtanh.pop %v946
    %v966 = vmul.f32 %v962, %v853
    %v967 = vmul.f32 %v960, %v965
    %v968 = vadd.f32 %v966, %v967
    %v969 = vtanh.pop %v968
    %v970 = vmul.f32 %v964, %v969
    %v971 = vld [vmem:[#allocation2 + $0x80] sm:$0xff]
    %v972 = vld [vmem:[#allocation2 + $0x88] sm:$0xff]
    %v973 = vld [vmem:[#allocation2 + $0x90] sm:$0xff]
    %v974 = vld [vmem:[#allocation2 + $0x98] sm:$0xff]
    %v975 = vpack.c.bf16 %v970, %v970
    %976 = vmatprep.subr.bf16.mxu0 %v453
    %977 = vmatpush1.bf16.msra.mxu0 %v452
    %978 = vmatprep.subr.bf16.mxu0 %v457
    %979 = vmatpush1.bf16.msra.mxu0 %v456
    %980 = vmatprep.subr.bf16.mxu0 %v461
    %981 = vmatpush1.bf16.msra.mxu0 %v460
    %982 = vmatprep.subr.bf16.mxu0 %v465
    %983 = vmatpush1.bf16.msra.mxu0 %v464
    %984 = vmatprep.subr.bf16.mxu0 %v469
    %985 = vmatpush1.bf16.msra.mxu0 %v468
    %986 = vmatprep.subr.bf16.mxu0 %v473
    %987 = vmatpush1.bf16.msra.mxu0 %v472
    %988 = vmatprep.subr.bf16.mxu0 %v477
    %989 = vmatpush1.bf16.msra.mxu0 %v476
    %990 = vmatprep.subr.bf16.mxu0 %v481
    %991 = vmatpush1.bf16.msra.mxu0 %v480
    %992 = vmatprep.subr.bf16.mxu0 0
    %993 = vmatpush1.bf16.msra.mxu0 0
    %994 = vmatprep.subr.bf16.mxu0 0
    %995 = vmatpush1.bf16.msra.mxu0 0
    %996 = vmatprep.subr.bf16.mxu0 0
    %997 = vmatpush1.bf16.msra.mxu0 0
    %998 = vmatprep.subr.bf16.mxu0 0
    %999 = vmatpush1.bf16.msra.mxu0 0
    %1000 = vmatprep.subr.bf16.mxu0 0
    %1001 = vmatpush1.bf16.msra.mxu0 0
    %1002 = vmatprep.subr.bf16.mxu0 0
    %1003 = vmatpush1.bf16.msra.mxu0 0
    %1004 = vmatprep.subr.bf16.mxu0 0
    %1005 = vmatpush1.bf16.msra.mxu0 0
    %1006 = vmatprep.subr.bf16.mxu0 0
    %1007 = vmatpush1.bf16.msra.mxu0 0
    %1008 = vmatprep.mubr.bf16.mxu0 0
    %1009 = vmatmul.mubr.bf16.gmra.mrb[0].mxu0 %v975
    %v1010 = vpop.f32.mrb[0].mxu0
    %v1011 = vadd.f32 0.0, %v1010
    %v1012 = vpop.f32.mrb[0].mxu0
    %v1013 = vadd.f32 0.0, %v1012
    %v1014 = vpop.f32.mrb[0].mxu0
    %v1015 = vpop.f32.mrb[0].mxu0
    %1016 = vdwg.mxu0
    %1017 = vmatprep.subr.bf16.mxu0 %v455
    %1018 = vmatpush1.bf16.msra.mxu0 %v454
    %1019 = vmatprep.subr.bf16.mxu0 %v459
    %1020 = vmatpush1.bf16.msra.mxu0 %v458
    %1021 = vmatprep.subr.bf16.mxu0 %v463
    %1022 = vmatpush1.bf16.msra.mxu0 %v462
    %1023 = vmatprep.subr.bf16.mxu0 %v467
    %1024 = vmatpush1.bf16.msra.mxu0 %v466
    %1025 = vmatprep.subr.bf16.mxu0 %v471
    %1026 = vmatpush1.bf16.msra.mxu0 %v470
    %1027 = vmatprep.subr.bf16.mxu0 %v475
    %1028 = vmatpush1.bf16.msra.mxu0 %v474
    %1029 = vmatprep.subr.bf16.mxu0 %v479
    %1030 = vmatpush1.bf16.msra.mxu0 %v478
    %1031 = vmatprep.subr.bf16.mxu0 %v483
    %1032 = vmatpush1.bf16.msra.mxu0 %v482
    %1033 = vmatprep.subr.bf16.mxu0 0
    %1034 = vmatpush1.bf16.msra.mxu0 0
    %1035 = vmatprep.subr.bf16.mxu0 0
    %1036 = vmatpush1.bf16.msra.mxu0 0
    %1037 = vmatprep.subr.bf16.mxu0 0
    %1038 = vmatpush1.bf16.msra.mxu0 0
    %1039 = vmatprep.subr.bf16.mxu0 0
    %1040 = vmatpush1.bf16.msra.mxu0 0
    %1041 = vmatprep.subr.bf16.mxu0 0
    %1042 = vmatpush1.bf16.msra.mxu0 0
    %1043 = vmatprep.subr.bf16.mxu0 0
    %1044 = vmatpush1.bf16.msra.mxu0 0
    %1045 = vmatprep.subr.bf16.mxu0 0
    %1046 = vmatpush1.bf16.msra.mxu0 0
    %1047 = vmatprep.subr.bf16.mxu0 0
    %1048 = vmatpush1.bf16.msra.mxu0 0
    %1049 = vmatprep.mubr.bf16.mxu0 0
    %1050 = vmatmul.mubr.bf16.gmra.mrb[0].mxu0 %v975
    %v1051 = vpop.f32.mrb[0].mxu0
    %v1052 = vadd.f32 0.0, %v1051
    %v1053 = vpop.f32.mrb[0].mxu0
    %v1054 = vadd.f32 0.0, %v1053
    %v1055 = vpop.f32.mrb[0].mxu0
    %v1056 = vpop.f32.mrb[0].mxu0
    %1057 = vdwg.mxu0
    %v1058 = vadd.f32 %v971, %v1011
    %v1059 = vadd.f32 %v972, %v1013
    %v1060 = vadd.f32 %v973, %v1052
    %v1061 = vadd.f32 %v974, %v1054
    %v1062 = vxor.u32 %v1058, 2147483648
    %v1063 = vxor.u32 %v1059, 2147483648
    %v1064 = vxor.u32 %v1060, 2147483648
    %v1065 = vmul.f32 %v1062, 1.442695
    %v1066 = vpow.pop %v1065
    %v1067 = vmul.f32 %v1063, 1.442695
    %v1068 = vpow.pop %v1067
    %v1069 = vmul.f32 %v1064, 1.442695
    %v1070 = vpow.pop %v1069
    %v1071 = vadd.f32 %v1066, 1.0
    %v1072 = vadd.f32 %v1068, 1.0
    %v1073 = vadd.f32 %v1070, 1.0
    %v1074 = vrcp.pop %v1071
    %v1075 = vmul.f32 1.0, %v1074
    %v1076 = vrcp.pop %v1072
    %v1077 = vmul.f32 1.0, %v1076
    %v1078 = vrcp.pop %v1073
    %v1079 = vmul.f32 1.0, %v1078
    %v1080 = vtanh.pop %v1061
    %v1081 = vmul.f32 %v1077, %v968
    %v1082 = vmul.f32 %v1075, %v1080
    %v1083 = vadd.f32 %v1081, %v1082
    %v1084 = vtanh.pop %v1083
    %v1085 = vmul.f32 %v1079, %v1084
    %v1086 = vld [vmem:[#allocation2 + $0xa0] sm:$0xff]
    %v1087 = vld [vmem:[#allocation2 + $0xa8] sm:$0xff]
    %v1088 = vld [vmem:[#allocation2 + $0xb0] sm:$0xff]
    %v1089 = vld [vmem:[#allocation2 + $0xb8] sm:$0xff]
    %v1090 = vpack.c.bf16 %v1085, %v1085
    %1091 = vmatprep.subr.bf16.mxu0 %v453
    %1092 = vmatpush1.bf16.msra.mxu0 %v452
    %1093 = vmatprep.subr.bf16.mxu0 %v457
    %1094 = vmatpush1.bf16.msra.mxu0 %v456
    %1095 = vmatprep.subr.bf16.mxu0 %v461
    %1096 = vmatpush1.bf16.msra.mxu0 %v460
    %1097 = vmatprep.subr.bf16.mxu0 %v465
    %1098 = vmatpush1.bf16.msra.mxu0 %v464
    %1099 = vmatprep.subr.bf16.mxu0 %v469
    %1100 = vmatpush1.bf16.msra.mxu0 %v468
    %1101 = vmatprep.subr.bf16.mxu0 %v473
    %1102 = vmatpush1.bf16.msra.mxu0 %v472
    %1103 = vmatprep.subr.bf16.mxu0 %v477
    %1104 = vmatpush1.bf16.msra.mxu0 %v476
    %1105 = vmatprep.subr.bf16.mxu0 %v481
    %1106 = vmatpush1.bf16.msra.mxu0 %v480
    %1107 = vmatprep.subr.bf16.mxu0 0
    %1108 = vmatpush1.bf16.msra.mxu0 0
    %1109 = vmatprep.subr.bf16.mxu0 0
    %1110 = vmatpush1.bf16.msra.mxu0 0
    %1111 = vmatprep.subr.bf16.mxu0 0
    %1112 = vmatpush1.bf16.msra.mxu0 0
    %1113 = vmatprep.subr.bf16.mxu0 0
    %1114 = vmatpush1.bf16.msra.mxu0 0
    %1115 = vmatprep.subr.bf16.mxu0 0
    %1116 = vmatpush1.bf16.msra.mxu0 0
    %1117 = vmatprep.subr.bf16.mxu0 0
    %1118 = vmatpush1.bf16.msra.mxu0 0
    %1119 = vmatprep.subr.bf16.mxu0 0
    %1120 = vmatpush1.bf16.msra.mxu0 0
    %1121 = vmatprep.subr.bf16.mxu0 0
    %1122 = vmatpush1.bf16.msra.mxu0 0
    %1123 = vmatprep.mubr.bf16.mxu0 0
    %1124 = vmatmul.mubr.bf16.gmra.mrb[0].mxu0 %v1090
    %v1125 = vpop.f32.mrb[0].mxu0
    %v1126 = vadd.f32 0.0, %v1125
    %v1127 = vpop.f32.mrb[0].mxu0
    %v1128 = vadd.f32 0.0, %v1127
    %v1129 = vpop.f32.mrb[0].mxu0
    %v1130 = vpop.f32.mrb[0].mxu0
    %1131 = vdwg.mxu0
    %1132 = vmatprep.subr.bf16.mxu0 %v455
    %1133 = vmatpush1.bf16.msra.mxu0 %v454
    %1134 = vmatprep.subr.bf16.mxu0 %v459
    %1135 = vmatpush1.bf16.msra.mxu0 %v458
    %1136 = vmatprep.subr.bf16.mxu0 %v463
    %1137 = vmatpush1.bf16.msra.mxu0 %v462
    %1138 = vmatprep.subr.bf16.mxu0 %v467
    %1139 = vmatpush1.bf16.msra.mxu0 %v466
    %1140 = vmatprep.subr.bf16.mxu0 %v471
    %1141 = vmatpush1.bf16.msra.mxu0 %v470
    %1142 = vmatprep.subr.bf16.mxu0 %v475
    %1143 = vmatpush1.bf16.msra.mxu0 %v474
    %1144 = vmatprep.subr.bf16.mxu0 %v479
    %1145 = vmatpush1.bf16.msra.mxu0 %v478
    %1146 = vmatprep.subr.bf16.mxu0 %v483
    %1147 = vmatpush1.bf16.msra.mxu0 %v482
    %1148 = vmatprep.subr.bf16.mxu0 0
    %1149 = vmatpush1.bf16.msra.mxu0 0
    %1150 = vmatprep.subr.bf16.mxu0 0
    %1151 = vmatpush1.bf16.msra.mxu0 0
    %1152 = vmatprep.subr.bf16.mxu0 0
    %1153 = vmatpush1.bf16.msra.mxu0 0
    %1154 = vmatprep.subr.bf16.mxu0 0
    %1155 = vmatpush1.bf16.msra.mxu0 0
    %1156 = vmatprep.subr.bf16.mxu0 0
    %1157 = vmatpush1.bf16.msra.mxu0 0
    %1158 = vmatprep.subr.bf16.mxu0 0
    %1159 = vmatpush1.bf16.msra.mxu0 0
    %1160 = vmatprep.subr.bf16.mxu0 0
    %1161 = vmatpush1.bf16.msra.mxu0 0
    %1162 = vmatprep.subr.bf16.mxu0 0
    %1163 = vmatpush1.bf16.msra.mxu0 0
    %1164 = vmatprep.mubr.bf16.mxu0 0
    %1165 = vmatmul.mubr.bf16.gmra.mrb[0].mxu0 %v1090
    %v1166 = vpop.f32.mrb[0].mxu0
    %v1167 = vadd.f32 0.0, %v1166
    %v1168 = vpop.f32.mrb[0].mxu0
    %v1169 = vadd.f32 0.0, %v1168
    %v1170 = vpop.f32.mrb[0].mxu0
    %v1171 = vpop.f32.mrb[0].mxu0
    %1172 = vdwg.mxu0
    %v1173 = vadd.f32 %v1086, %v1126
    %v1174 = vadd.f32 %v1087, %v1128
    %v1175 = vadd.f32 %v1088, %v1167
    %v1176 = vadd.f32 %v1089, %v1169
    %v1177 = vxor.u32 %v1173, 2147483648
    %v1178 = vxor.u32 %v1174, 2147483648
    %v1179 = vxor.u32 %v1175, 2147483648
    %v1180 = vmul.f32 %v1177, 1.442695
    %v1181 = vpow.pop %v1180
    %v1182 = vmul.f32 %v1178, 1.442695
    %v1183 = vpow.pop %v1182
    %v1184 = vmul.f32 %v1179, 1.442695
    %v1185 = vpow.pop %v1184
    %v1186 = vadd.f32 %v1181, 1.0
    %v1187 = vadd.f32 %v1183, 1.0
    %v1188 = vadd.f32 %v1185, 1.0
    %v1189 = vrcp.pop %v1186
    %v1190 = vmul.f32 1.0, %v1189
    %v1191 = vrcp.pop %v1187
    %v1192 = vmul.f32 1.0, %v1191
    %v1193 = vrcp.pop %v1188
    %v1194 = vmul.f32 1.0, %v1193
    %v1195 = vtanh.pop %v1176
    %v1196 = vmul.f32 %v1192, %v1083
    %v1197 = vmul.f32 %v1190, %v1195
    %v1198 = vadd.f32 %v1196, %v1197
    %v1199 = vtanh.pop %v1198
    %v1200 = vmul.f32 %v1194, %v1199
    %v1201 = vld [vmem:[#allocation2 + $0xc0] sm:$0xff]
    %v1202 = vld [vmem:[#allocation2 + $0xc8] sm:$0xff]
    %v1203 = vld [vmem:[#allocation2 + $0xd0] sm:$0xff]
    %v1204 = vld [vmem:[#allocation2 + $0xd8] sm:$0xff]
    %v1205 = vpack.c.bf16 %v1200, %v1200
    %1206 = vmatprep.subr.bf16.mxu0 %v453
    %1207 = vmatpush1.bf16.msra.mxu0 %v452
    %1208 = vmatprep.subr.bf16.mxu0 %v457
    %1209 = vmatpush1.bf16.msra.mxu0 %v456
    %1210 = vmatprep.subr.bf16.mxu0 %v461
    %1211 = vmatpush1.bf16.msra.mxu0 %v460
    %1212 = vmatprep.subr.bf16.mxu0 %v465
    %1213 = vmatpush1.bf16.msra.mxu0 %v464
    %1214 = vmatprep.subr.bf16.mxu0 %v469
    %1215 = vmatpush1.bf16.msra.mxu0 %v468
    %1216 = vmatprep.subr.bf16.mxu0 %v473
    %1217 = vmatpush1.bf16.msra.mxu0 %v472
    %1218 = vmatprep.subr.bf16.mxu0 %v477
    %1219 = vmatpush1.bf16.msra.mxu0 %v476
    %1220 = vmatprep.subr.bf16.mxu0 %v481
    %1221 = vmatpush1.bf16.msra.mxu0 %v480
    %1222 = vmatprep.subr.bf16.mxu0 0
    %1223 = vmatpush1.bf16.msra.mxu0 0
    %1224 = vmatprep.subr.bf16.mxu0 0
    %1225 = vmatpush1.bf16.msra.mxu0 0
    %1226 = vmatprep.subr.bf16.mxu0 0
    %1227 = vmatpush1.bf16.msra.mxu0 0
    %1228 = vmatprep.subr.bf16.mxu0 0
    %1229 = vmatpush1.bf16.msra.mxu0 0
    %1230 = vmatprep.subr.bf16.mxu0 0
    %1231 = vmatpush1.bf16.msra.mxu0 0
    %1232 = vmatprep.subr.bf16.mxu0 0
    %1233 = vmatpush1.bf16.msra.mxu0 0
    %1234 = vmatprep.subr.bf16.mxu0 0
    %1235 = vmatpush1.bf16.msra.mxu0 0
    %1236 = vmatprep.subr.bf16.mxu0 0
    %1237 = vmatpush1.bf16.msra.mxu0 0
    %1238 = vmatprep.mubr.bf16.mxu0 0
    %1239 = vmatmul.mubr.bf16.gmra.mrb[0].mxu0 %v1205
    %v1240 = vpop.f32.mrb[0].mxu0
    %v1241 = vadd.f32 0.0, %v1240
    %v1242 = vpop.f32.mrb[0].mxu0
    %v1243 = vadd.f32 0.0, %v1242
    %v1244 = vpop.f32.mrb[0].mxu0
    %v1245 = vpop.f32.mrb[0].mxu0
    %1246 = vdwg.mxu0
    %1247 = vmatprep.subr.bf16.mxu0 %v455
    %1248 = vmatpush1.bf16.msra.mxu0 %v454
    %1249 = vmatprep.subr.bf16.mxu0 %v459
    %1250 = vmatpush1.bf16.msra.mxu0 %v458
    %1251 = vmatprep.subr.bf16.mxu0 %v463
    %1252 = vmatpush1.bf16.msra.mxu0 %v462
    %1253 = vmatprep.subr.bf16.mxu0 %v467
    %1254 = vmatpush1.bf16.msra.mxu0 %v466
    %1255 = vmatprep.subr.bf16.mxu0 %v471
    %1256 = vmatpush1.bf16.msra.mxu0 %v470
    %1257 = vmatprep.subr.bf16.mxu0 %v475
    %1258 = vmatpush1.bf16.msra.mxu0 %v474
    %1259 = vmatprep.subr.bf16.mxu0 %v479
    %1260 = vmatpush1.bf16.msra.mxu0 %v478
    %1261 = vmatprep.subr.bf16.mxu0 %v483
    %1262 = vmatpush1.bf16.msra.mxu0 %v482
    %1263 = vmatprep.subr.bf16.mxu0 0
    %1264 = vmatpush1.bf16.msra.mxu0 0
    %1265 = vmatprep.subr.bf16.mxu0 0
    %1266 = vmatpush1.bf16.msra.mxu0 0
    %1267 = vmatprep.subr.bf16.mxu0 0
    %1268 = vmatpush1.bf16.msra.mxu0 0
    %1269 = vmatprep.subr.bf16.mxu0 0
    %1270 = vmatpush1.bf16.msra.mxu0 0
    %1271 = vmatprep.subr.bf16.mxu0 0
    %1272 = vmatpush1.bf16.msra.mxu0 0
    %1273 = vmatprep.subr.bf16.mxu0 0
    %1274 = vmatpush1.bf16.msra.mxu0 0
    %1275 = vmatprep.subr.bf16.mxu0 0
    %1276 = vmatpush1.bf16.msra.mxu0 0
    %1277 = vmatprep.subr.bf16.mxu0 0
    %1278 = vmatpush1.bf16.msra.mxu0 0
    %1279 = vmatprep.mubr.bf16.mxu0 0
    %1280 = vmatmul.mubr.bf16.gmra.mrb[0].mxu0 %v1205
    %v1281 = vpop.f32.mrb[0].mxu0
    %v1282 = vadd.f32 0.0, %v1281
    %v1283 = vpop.f32.mrb[0].mxu0
    %v1284 = vadd.f32 0.0, %v1283
    %v1285 = vpop.f32.mrb[0].mxu0
    %v1286 = vpop.f32.mrb[0].mxu0
    %1287 = vdwg.mxu0
    %v1288 = vadd.f32 %v1201, %v1241
    %v1289 = vadd.f32 %v1202, %v1243
    %v1290 = vadd.f32 %v1203, %v1282
    %v1291 = vadd.f32 %v1204, %v1284
    %v1292 = vxor.u32 %v1288, 2147483648
    %v1293 = vxor.u32 %v1289, 2147483648
    %v1294 = vxor.u32 %v1290, 2147483648
    %v1295 = vmul.f32 %v1292, 1.442695
    %v1296 = vpow.pop %v1295
    %v1297 = vmul.f32 %v1293, 1.442695
    %v1298 = vpow.pop %v1297
    %v1299 = vmul.f32 %v1294, 1.442695
    %v1300 = vpow.pop %v1299
    %v1301 = vadd.f32 %v1296, 1.0
    %v1302 = vadd.f32 %v1298, 1.0
    %v1303 = vadd.f32 %v1300, 1.0
    %v1304 = vrcp.pop %v1301
    %v1305 = vmul.f32 1.0, %v1304
    %v1306 = vrcp.pop %v1302
    %v1307 = vmul.f32 1.0, %v1306
    %v1308 = vrcp.pop %v1303
    %v1309 = vmul.f32 1.0, %v1308
    %v1310 = vtanh.pop %v1291
    %v1311 = vmul.f32 %v1307, %v1198
    %v1312 = vmul.f32 %v1305, %v1310
    %v1313 = vadd.f32 %v1311, %v1312
    %v1314 = vtanh.pop %v1313
    %v1315 = vmul.f32 %v1309, %v1314
    %v1316 = vld [vmem:[#allocation2 + $0xe0] sm:$0xff]
    %v1317 = vld [vmem:[#allocation2 + $0xe8] sm:$0xff]
    %v1318 = vld [vmem:[#allocation2 + $0xf0] sm:$0xff]
    %v1319 = vld [vmem:[#allocation2 + $0xf8] sm:$0xff]
    %v1320 = vpack.c.bf16 %v1315, %v1315
    %1321 = vmatprep.subr.bf16.mxu0 %v453
    %1322 = vmatpush1.bf16.msra.mxu0 %v452
    %1323 = vmatprep.subr.bf16.mxu0 %v457
    %1324 = vmatpush1.bf16.msra.mxu0 %v456
    %1325 = vmatprep.subr.bf16.mxu0 %v461
    %1326 = vmatpush1.bf16.msra.mxu0 %v460
    %1327 = vmatprep.subr.bf16.mxu0 %v465
    %1328 = vmatpush1.bf16.msra.mxu0 %v464
    %1329 = vmatprep.subr.bf16.mxu0 %v469
    %1330 = vmatpush1.bf16.msra.mxu0 %v468
    %1331 = vmatprep.subr.bf16.mxu0 %v473
    %1332 = vmatpush1.bf16.msra.mxu0 %v472
    %1333 = vmatprep.subr.bf16.mxu0 %v477
    %1334 = vmatpush1.bf16.msra.mxu0 %v476
    %1335 = vmatprep.subr.bf16.mxu0 %v481
    %1336 = vmatpush1.bf16.msra.mxu0 %v480
    %1337 = vmatprep.subr.bf16.mxu0 0
    %1338 = vmatpush1.bf16.msra.mxu0 0
    %1339 = vmatprep.subr.bf16.mxu0 0
    %1340 = vmatpush1.bf16.msra.mxu0 0
    %1341 = vmatprep.subr.bf16.mxu0 0
    %1342 = vmatpush1.bf16.msra.mxu0 0
    %1343 = vmatprep.subr.bf16.mxu0 0
    %1344 = vmatpush1.bf16.msra.mxu0 0
    %1345 = vmatprep.subr.bf16.mxu0 0
    %1346 = vmatpush1.bf16.msra.mxu0 0
    %1347 = vmatprep.subr.bf16.mxu0 0
    %1348 = vmatpush1.bf16.msra.mxu0 0
    %1349 = vmatprep.subr.bf16.mxu0 0
    %1350 = vmatpush1.bf16.msra.mxu0 0
    %1351 = vmatprep.subr.bf16.mxu0 0
    %1352 = vmatpush1.bf16.msra.mxu0 0
    %1353 = vmatprep.mubr.bf16.mxu0 0
    %1354 = vmatmul.mubr.bf16.gmra.mrb[0].mxu0 %v1320
    %v1355 = vpop.f32.mrb[0].mxu0
    %v1356 = vadd.f32 0.0, %v1355
    %v1357 = vpop.f32.mrb[0].mxu0
    %v1358 = vadd.f32 0.0, %v1357
    %v1359 = vpop.f32.mrb[0].mxu0
    %v1360 = vpop.f32.mrb[0].mxu0
    %1361 = vdwg.mxu0
    %1362 = vmatprep.subr.bf16.mxu0 %v455
    %1363 = vmatpush1.bf16.msra.mxu0 %v454
    %1364 = vmatprep.subr.bf16.mxu0 %v459
    %1365 = vmatpush1.bf16.msra.mxu0 %v458
    %1366 = vmatprep.subr.bf16.mxu0 %v463
    %1367 = vmatpush1.bf16.msra.mxu0 %v462
    %1368 = vmatprep.subr.bf16.mxu0 %v467
    %1369 = vmatpush1.bf16.msra.mxu0 %v466
    %1370 = vmatprep.subr.bf16.mxu0 %v471
    %1371 = vmatpush1.bf16.msra.mxu0 %v470
    %1372 = vmatprep.subr.bf16.mxu0 %v475
    %1373 = vmatpush1.bf16.msra.mxu0 %v474
    %1374 = vmatprep.subr.bf16.mxu0 %v479
    %1375 = vmatpush1.bf16.msra.mxu0 %v478
    %1376 = vmatprep.subr.bf16.mxu0 %v483
    %1377 = vmatpush1.bf16.msra.mxu0 %v482
    %1378 = vmatprep.subr.bf16.mxu0 0
    %1379 = vmatpush1.bf16.msra.mxu0 0
    %1380 = vmatprep.subr.bf16.mxu0 0
    %1381 = vmatpush1.bf16.msra.mxu0 0
    %1382 = vmatprep.subr.bf16.mxu0 0
    %1383 = vmatpush1.bf16.msra.mxu0 0
    %1384 = vmatprep.subr.bf16.mxu0 0
    %1385 = vmatpush1.bf16.msra.mxu0 0
    %1386 = vmatprep.subr.bf16.mxu0 0
    %1387 = vmatpush1.bf16.msra.mxu0 0
    %1388 = vmatprep.subr.bf16.mxu0 0
    %1389 = vmatpush1.bf16.msra.mxu0 0
    %1390 = vmatprep.subr.bf16.mxu0 0
    %1391 = vmatpush1.bf16.msra.mxu0 0
    %1392 = vmatprep.subr.bf16.mxu0 0
    %1393 = vmatpush1.bf16.msra.mxu0 0
    %1394 = vmatprep.mubr.bf16.mxu0 0
    %1395 = vmatmul.mubr.bf16.gmra.mrb[0].mxu0 %v1320
    %v1396 = vpop.f32.mrb[0].mxu0
    %v1397 = vadd.f32 0.0, %v1396
    %v1398 = vpop.f32.mrb[0].mxu0
    %v1399 = vadd.f32 0.0, %v1398
    %v1400 = vpop.f32.mrb[0].mxu0
    %v1401 = vpop.f32.mrb[0].mxu0
    %1402 = vdwg.mxu0
    %v1403 = vadd.f32 %v1316, %v1356
    %v1404 = vadd.f32 %v1317, %v1358
    %v1405 = vadd.f32 %v1318, %v1397
    %v1406 = vadd.f32 %v1319, %v1399
    %v1407 = vxor.u32 %v1403, 2147483648
    %v1408 = vxor.u32 %v1404, 2147483648
    %v1409 = vxor.u32 %v1405, 2147483648
    %v1410 = vmul.f32 %v1407, 1.442695
    %v1411 = vpow.pop %v1410
    %v1412 = vmul.f32 %v1408, 1.442695
    %v1413 = vpow.pop %v1412
    %v1414 = vmul.f32 %v1409, 1.442695
    %v1415 = vpow.pop %v1414
    %v1416 = vadd.f32 %v1411, 1.0
    %v1417 = vadd.f32 %v1413, 1.0
    %v1418 = vadd.f32 %v1415, 1.0
    %v1419 = vrcp.pop %v1416
    %v1420 = vmul.f32 1.0, %v1419
    %v1421 = vrcp.pop %v1417
    %v1422 = vmul.f32 1.0, %v1421
    %v1423 = vrcp.pop %v1418
    %v1424 = vmul.f32 1.0, %v1423
    %v1425 = vtanh.pop %v1406
    %v1426 = vmul.f32 %v1422, %v1313
    %v1427 = vmul.f32 %v1420, %v1425
    %v1428 = vadd.f32 %v1426, %v1427
    %v1429 = vtanh.pop %v1428
    %v1430 = vmul.f32 %v1424, %v1429
    %v1431 = vpack.c.bf16 %v1430, %v1430
    %v1432 = vld [vmem:[%s4] sm:$0xf]
    %v1433 = vld [vmem:[%s4 + $0x4] sm:$0xf]
    %v1434 = vld [vmem:[%s4 + $0x8] sm:$0xf]
    %v1435 = vld [vmem:[%s4 + $0xc] sm:$0xf]
    %v1436 = vld [vmem:[%s4 + $0x10] sm:$0xf]
    %v1437 = vld [vmem:[%s4 + $0x14] sm:$0xf]
    %v1438 = vld [vmem:[%s4 + $0x18] sm:$0xf]
    %v1439 = vld [vmem:[%s4 + $0x1c] sm:$0xf]
    %v1440 = vld [vmem:[%s4 + $0x20] sm:$0xf]
    %v1441 = vld [vmem:[%s4 + $0x24] sm:$0xf]
    %v1442 = vld [vmem:[%s4 + $0x28] sm:$0xf]
    %v1443 = vld [vmem:[%s4 + $0x2c] sm:$0xf]
    %v1444 = vld [vmem:[%s4 + $0x30] sm:$0xf]
    %v1445 = vld [vmem:[%s4 + $0x34] sm:$0xf]
    %v1446 = vld [vmem:[%s4 + $0x38] sm:$0xf]
    %v1447 = vld [vmem:[%s4 + $0x3c] sm:$0xf]
    %v1448 = vld [vmem:[%s5] sm:$0x1]
    %v1450 = vlaneseq
    %v1451 = vshrl.u32 %v1450, 7
    %v1452 = vsub.s32 0, %v1451
    %v1453 = vrot.slane %v1448, %v1452
    %v1471 = vunpack.c.l.b16 %v1432
    %v1472 = vunpack.c.l.b16 %v1433
    %v1473 = vunpack.c.l.b16 %v1434
    %v1474 = vunpack.c.l.b16 %v1435
    %v1475 = vunpack.c.l.b16 %v1436
    %v1476 = vunpack.c.l.b16 %v1437
    %v1477 = vunpack.c.l.b16 %v1438
    %v1478 = vunpack.c.l.b16 %v1439
    %v1479 = vunpack.c.l.b16 %v1440
    %v1480 = vunpack.c.l.b16 %v1441
    %v1481 = vunpack.c.l.b16 %v1442
    %v1482 = vunpack.c.l.b16 %v1443
    %v1483 = vunpack.c.l.b16 %v1444
    %v1484 = vunpack.c.l.b16 %v1445
    %v1485 = vunpack.c.l.b16 %v1446
    %v1486 = vunpack.c.l.b16 %v1447
    %v1487 = vpack.c.b16 %v1472, %v1471
    %v1488 = vpack.c.b16 %v1474, %v1473
    %v1489 = vpack.c.b16 %v1476, %v1475
    %v1490 = vpack.c.b16 %v1478, %v1477
    %v1491 = vpack.c.b16 %v1480, %v1479
    %v1492 = vpack.c.b16 %v1482, %v1481
    %v1493 = vpack.c.b16 %v1484, %v1483
    %v1494 = vpack.c.b16 %v1486, %v1485
    %1503 = vmatprep.subr.bf16.mxu0 0
    %1504 = vmatpush1.bf16.msra.mxu0 %v1487
    %1505 = vmatprep.subr.bf16.mxu0 0
    %1506 = vmatpush1.bf16.msra.mxu0 %v1488
    %1507 = vmatprep.subr.bf16.mxu0 0
    %1508 = vmatpush1.bf16.msra.mxu0 %v1489
    %1509 = vmatprep.subr.bf16.mxu0 0
    %1510 = vmatpush1.bf16.msra.mxu0 %v1490
    %1511 = vmatprep.subr.bf16.mxu0 0
    %1512 = vmatpush1.bf16.msra.mxu0 %v1491
    %1513 = vmatprep.subr.bf16.mxu0 0
    %1514 = vmatpush1.bf16.msra.mxu0 %v1492
    %1515 = vmatprep.subr.bf16.mxu0 0
    %1516 = vmatpush1.bf16.msra.mxu0 %v1493
    %1517 = vmatprep.subr.bf16.mxu0 0
    %1518 = vmatpush1.bf16.msra.mxu0 %v1494
    %1519 = vmatprep.subr.bf16.mxu0 0
    %1520 = vmatpush1.bf16.msra.mxu0 0
    %1521 = vmatprep.subr.bf16.mxu0 0
    %1522 = vmatpush1.bf16.msra.mxu0 0
    %1523 = vmatprep.subr.bf16.mxu0 0
    %1524 = vmatpush1.bf16.msra.mxu0 0
    %1525 = vmatprep.subr.bf16.mxu0 0
    %1526 = vmatpush1.bf16.msra.mxu0 0
    %1527 = vmatprep.subr.bf16.mxu0 0
    %1528 = vmatpush1.bf16.msra.mxu0 0
    %1529 = vmatprep.subr.bf16.mxu0 0
    %1530 = vmatpush1.bf16.msra.mxu0 0
    %1531 = vmatprep.subr.bf16.mxu0 0
    %1532 = vmatpush1.bf16.msra.mxu0 0
    %1533 = vmatprep.subr.bf16.mxu0 0
    %1534 = vmatpush1.bf16.msra.mxu0 0
    %1535 = vmatprep.mubr.bf16.mxu0 0
    %1536 = vmatmul.mubr.bf16.gmra.mrb[0].mxu0 %v1431
    %v1537 = vpop.f32.mrb[0].mxu0
    %v1538 = vadd.f32 %v1453, %v1537
    %v1539 = vpop.f32.mrb[0].mxu0
    %v1540 = vpop.f32.mrb[0].mxu0
    %v1541 = vpop.f32.mrb[0].mxu0
    %1542 = vdwg.mxu0
    %v1543 = vxor.u32 %v1538, 2147483648
    %v1544 = vmul.f32 %v1543, 1.442695
    %v1545 = vpow.pop %v1544
    %v1546 = vadd.f32 %v1545, 1.0
    %v1547 = vrcp.pop %v1546
    %v1548 = vmul.f32 1.0, %v1547
    %v1549 = vld [vmem:[%s6] sm:$0x1]
    %v1551 = vlaneseq
    %v1552 = vshrl.u32 %v1551, 7
    %v1553 = vsub.s32 0, %v1552
    %v1554 = vrot.slane %v1549, %v1553
    %v1556 = vmul.f32 %v1548, %v1554
    %1557 = vadd.xlane.f32.xlu0 %v1556
    %v1558 = vpop.xlane.xlu0 %1557
    %v1559 = vld [vmem:[#allocation3] sm:$0x1]
    %v1561 = vlaneseq
    %v1562 = vshrl.u32 %v1561, 7
    %v1563 = vsub.s32 0, %v1562
    %v1564 = vrot.slane %v1559, %v1563
    %v1566 = vadd.f32 %v1558, %v1564
    %1568 = vset.pattern.permute.xlu0 0
    %1569 = vperm.xlu0 %1568, %v1566
    %v1570 = vpop.permute.xlu0 %1569
    %1572 = vst [vmem:[%s8] sm:$0xff] %v1570
    // Predicated region
    $region38: #{regressor_v1_forward.1} parent=1 // pred_check
      _
    $region39: #{regressor_v1_forward.1} parent=1 // pred_check_branch
      %1574 = sbr.rel (0) target = $region41
    $region40: #{regressor_v1_forward.1} parent=1 // pred_region
      _
    $region41: #{regressor_v1_forward.1} parent=1 // pred_fallthru
      _
    // Predicated region
    $region42: #{regressor_v1_forward.1} parent=1 // pred_check
      _
    $region43: #{regressor_v1_forward.1} parent=1 // pred_check_branch
      %1576 = sbr.rel (0) target = $region45
    $region44: #{regressor_v1_forward.1} parent=1 // pred_region
      _
    $region45: #{regressor_v1_forward.1} parent=1 // pred_fallthru
      _
    %1577 = vsyncpa [#allocation5], 1

</llo_original>
